<compile_context>
chip_gen: v6e
topology: v6e:2x2x1
jax: 0.10.0
libtpu: 0.0.40
codegen_flags: <defaults>
</compile_context>

<pallas_src>
import jax
import jax.numpy as jnp
from jax.experimental import pallas as pl
from jax.experimental.pallas import tpu as pltpu


# ------------------------------ fused kernel ---------------------------------
# Inputs (all resident in VMEM, grid-less):
#   f1, f2 : (B, D)   bf16 activations (frame 1, frame 2)
#   w1     : (D, 4Z)  bf16 fused f1 weights, cols [logvar | mu | muv | logvarv]
#   w2     : (D, 2Z)  bf16 fused f2 weights, cols [muv | logvarv]
#   b1     : (1, 4Z)  f32  fused encoder bias (same column layout as w1)
#   wd     : (2Z, D)  bf16 fused decoder weights, rows [w_z ; w_v]
#   bd     : (1, D)   f32  decoder bias
# Outputs:
#   enc    : (B, 4Z)  f32  [logvar | mu | muv | logvarv]  (lane-dense, 4Z = 128)
#   recon  : (B, D)   f32
def _fused_kernel(f1_ref, f2_ref, w1_ref, w2_ref, b1_ref, wd_ref, bd_ref,
                  enc_ref, recon_ref):
    Z2 = w2_ref.shape[1]            # 2Z
    Z = Z2 // 2
    B = f1_ref.shape[0]

    f1 = f1_ref[...]                # bf16
    f2 = f2_ref[...]                # bf16

    # encode_shape(F1) + encode_motion(cat([F1, F2], 1)), fused lane-dense
    # weights.  bf16 operands go straight to the MXU; accumulation is f32.
    e1 = jnp.dot(f1, w1_ref[...], preferred_element_type=jnp.float32)   # (B, 4Z)
    e2 = jnp.dot(f2, w2_ref[...], preferred_element_type=jnp.float32)   # (B, 2Z)

    # e2 contributes to columns [2Z:4Z] (muv, logvarv); pad-left and add once.
    pad = jnp.zeros((B, Z2), jnp.float32)
    enc = e1 + jnp.concatenate([pad, e2], axis=1) + b1_ref[...]
    enc_ref[...] = enc

    # Eval-mode reparameterize: z = mu, v = muv.
    # tangle = cat([z, v], 1) = enc[:, Z:3Z] (contiguous by construction).
    latent = enc[:, Z:3 * Z].astype(jnp.bfloat16)                       # (B, 2Z)

    recon_ref[...] = (
        jnp.dot(latent, wd_ref[...], preferred_element_type=jnp.float32)
        + bd_ref[...]
    )


# ------------------------------- wrapper --------------------------------------
def base_temp_model_forward(x, y_true, params):
    """x, y_true: NCHW float32 arrays of identical shape. Returns (recon, state)."""
    B, C, H, W = x.shape
    D = C * H * W
    Z4 = params["w_enc_f1"].shape[1]
    Z = Z4 // 4
    Z2 = 2 * Z

    # bf16 activations feed the MXU natively (f32 accumulation in-kernel).
    f1 = x.reshape(B, D).astype(jnp.bfloat16)
    f2 = y_true.reshape(B, D).astype(jnp.bfloat16)

    vmem = pl.BlockSpec(memory_space=pltpu.MemorySpace.VMEM)

    enc, recon_flat = pl.pallas_call(
        _fused_kernel,
        in_specs=[vmem] * 7,
        out_specs=(vmem, vmem),
        out_shape=(
            jax.ShapeDtypeStruct((B, Z4), jnp.float32),
            jax.ShapeDtypeStruct((B, D), jnp.float32),
        ),
        cost_estimate=pl.CostEstimate(
            flops=2 * B * D * 6 * Z + 2 * B * Z2 * D,
            transcendentals=0,
            bytes_accessed=(2 * B * D * 2            # f1, f2 (bf16)
                            + D * 6 * Z * 2          # encoder weights (bf16)
                            + Z2 * D * 2             # decoder weights (bf16)
                            + (Z4 + D) * 4           # biases (f32)
                            + B * (Z4 + D) * 4)),    # outputs (f32)
    )(f1, f2, params["w_enc_f1"], params["w_enc_f2"], params["b_enc"],
      params["w_dec"], params["b_dec"])

    # Column layout: [logvar | mu | muv | logvarv]
    logvar = enc[:, 0:Z]
    mu = enc[:, Z:2 * Z]
    muv = enc[:, 2 * Z:3 * Z]
    logvarv = enc[:, 3 * Z:4 * Z]

    # Eval-mode: z = mu, v = muv; COMB = cat([mu, muv], 1) = enc[:, Z:3Z].
    z = mu
    v = muv
    comb = enc[:, Z:3 * Z]

    state = {
        "MU": mu, "LOGVAR": logvar,
        "MUV": muv, "LOGVARV": logvarv,
        "V": v, "Z": z, "COMB": comb,
    }
    return recon_flat.reshape(x.shape), state


# -------------------------------- params --------------------------------------
def init_params(key, D, Z):
    ks = jax.random.split(key, 12)
    s = 0.02
    ws_mu = jax.random.normal(ks[0], (D, Z), jnp.float32) * s
    ws_lv = jax.random.normal(ks[1], (D, Z), jnp.float32) * s
    wm1_mu = jax.random.normal(ks[2], (D, Z), jnp.float32) * s
    wm1_lv = jax.random.normal(ks[3], (D, Z), jnp.float32) * s
    wm2_mu = jax.random.normal(ks[4], (D, Z), jnp.float32) * s
    wm2_lv = jax.random.normal(ks[5], (D, Z), jnp.float32) * s
    wd_z = jax.random.normal(ks[6], (Z, D), jnp.float32) * s
    wd_v = jax.random.normal(ks[7], (Z, D), jnp.float32) * s
    bs_mu = jax.random.normal(ks[8], (1, Z), jnp.float32) * s
    bs_lv = jax.random.normal(ks[9], (1, Z), jnp.float32) * s
    bm_mu = jax.random.normal(ks[10], (1, Z), jnp.float32) * s
    bm_lv = jax.random.normal(ks[11], (1, Z), jnp.float32) * s
    return {
        # Fused bf16 weights; column layout [logvar | mu | muv | logvarv] so the
        # decoder latent [mu | muv] is a contiguous lane slice in-kernel.
        "w_enc_f1": jnp.concatenate([ws_lv, ws_mu, wm1_mu, wm1_lv],
                                    axis=1).astype(jnp.bfloat16),          # (D, 4Z)
        "w_enc_f2": jnp.concatenate([wm2_mu, wm2_lv],
                                    axis=1).astype(jnp.bfloat16),          # (D, 2Z)
        "b_enc": jnp.concatenate([bs_lv, bs_mu, bm_mu, bm_lv], axis=1),    # (1, 4Z) f32
        "w_dec": jnp.concatenate([wd_z, wd_v], axis=0).astype(jnp.bfloat16),  # (2Z, D)
        "b_dec": jnp.zeros((1, D), jnp.float32),
    }


if __name__ == "__main__":
    B, C, H, W = 2, 4, 16, 16
    D = C * H * W          # 1024
    Z = 32                 # latent size -> 4Z = 128 (lane-dense)

    key = jax.random.PRNGKey(0)
    kx, ky, kp = jax.random.split(key, 3)
    x = jax.random.normal(kx, (B, C, H, W), jnp.float32)
    y_true = jax.random.normal(ky, (B, C, H, W), jnp.float32)   # state[tb.Y_TRUE]
    params = init_params(kp, D, Z)

    fwd = jax.jit(base_temp_model_forward)
    recon, state = fwd(x, y_true, params)
    recon = jax.block_until_ready(recon)

    assert recon.shape == x.shape
    assert state["MU"].shape == (B, Z) and state["COMB"].shape == (B, 2 * Z)

    # Pure-JAX reference of the same math (same bf16-rounded weights/activations,
    # f32 compute/accumulation).
    f1_r = x.reshape(B, D).astype(jnp.bfloat16).astype(jnp.float32)
    f2_r = y_true.reshape(B, D).astype(jnp.bfloat16).astype(jnp.float32)
    w1_r = params["w_enc_f1"].astype(jnp.float32)
    w2_r = params["w_enc_f2"].astype(jnp.float32)
    wd_r = params["w_dec"].astype(jnp.float32)
    e1_r = f1_r @ w1_r
    e2_r = f2_r @ w2_r
    enc_r = e1_r + jnp.concatenate(
        [jnp.zeros((B, 2 * Z), jnp.float32), e2_r], axis=1) + params["b_enc"]
    lv_r = enc_r[:, 0:Z]
    mu_r = enc_r[:, Z:2 * Z]
    muv_r = enc_r[:, 2 * Z:3 * Z]
    lvv_r = enc_r[:, 3 * Z:4 * Z]
    lat_r = enc_r[:, Z:3 * Z].astype(jnp.bfloat16).astype(jnp.float32)
    recon_r = (lat_r @ wd_r + params["b_dec"]).reshape(x.shape)

    assert jnp.allclose(state["MU"], mu_r, atol=1e-4, rtol=1e-3)
    assert jnp.allclose(state["LOGVAR"], lv_r, atol=1e-4, rtol=1e-3)
    assert jnp.allclose(state["MUV"], muv_r, atol=1e-4, rtol=1e-3)
    assert jnp.allclose(state["LOGVARV"], lvv_r, atol=1e-4, rtol=1e-3)
    assert jnp.allclose(state["COMB"], jnp.concatenate([mu_r, muv_r], axis=1),
                        atol=1e-4, rtol=1e-3)
    assert jnp.allclose(recon, recon_r, atol=1e-4, rtol=1e-3)

    print("KERNEL_OK")
</pallas_src>

<mosaic_0001>
module attributes {stable_mosaic.version = 11 : i64} {
  func.func @_fused_kernel(%arg0: memref<2x1024xbf16, #tpu.memory_space<vmem>>, %arg1: memref<2x1024xbf16, #tpu.memory_space<vmem>>, %arg2: memref<1024x128xbf16, #tpu.memory_space<vmem>>, %arg3: memref<1024x64xbf16, #tpu.memory_space<vmem>>, %arg4: memref<1x128xf32, #tpu.memory_space<vmem>>, %arg5: memref<64x1024xbf16, #tpu.memory_space<vmem>>, %arg6: memref<1x1024xf32, #tpu.memory_space<vmem>>, %arg7: memref<2x128xf32, #tpu.memory_space<vmem>>, %arg8: memref<2x1024xf32, #tpu.memory_space<vmem>>) attributes {dimension_semantics = [], scalar_prefetch = 0 : i64, scratch_operands = 0 : i64, tpu.core_type = #tpu.core_type<tc>} {
    %c0 = arith.constant 0 : index
    %c0_0 = arith.constant 0 : index
    %0 = vector.load %arg0[%c0, %c0_0] : memref<2x1024xbf16, #tpu.memory_space<vmem>>, vector<2x1024xbf16>
    %c0_1 = arith.constant 0 : index
    %c0_2 = arith.constant 0 : index
    %1 = vector.load %arg1[%c0_1, %c0_2] : memref<2x1024xbf16, #tpu.memory_space<vmem>>, vector<2x1024xbf16>
    %c0_3 = arith.constant 0 : index
    %c0_4 = arith.constant 0 : index
    %2 = vector.load %arg2[%c0_3, %c0_4] : memref<1024x128xbf16, #tpu.memory_space<vmem>>, vector<1024x128xbf16>
    %cst = arith.constant dense<0.000000e+00> : vector<2x128xf32>
    %3 = tpu.matmul %0, %2, %cst {dimension_numbers = #tpu.dot_dimension_numbers<[1], [0], [0], [1], [0, 0, 1, 1], [], []>} : vector<2x1024xbf16>, vector<1024x128xbf16>, vector<2x128xf32> -> vector<2x128xf32>
    %c0_5 = arith.constant 0 : index
    %c0_6 = arith.constant 0 : index
    %4 = vector.load %arg3[%c0_5, %c0_6] : memref<1024x64xbf16, #tpu.memory_space<vmem>>, vector<1024x64xbf16>
    %cst_7 = arith.constant dense<0.000000e+00> : vector<2x64xf32>
    %5 = tpu.matmul %1, %4, %cst_7 {dimension_numbers = #tpu.dot_dimension_numbers<[1], [0], [0], [1], [0, 0, 1, 1], [], []>} : vector<2x1024xbf16>, vector<1024x64xbf16>, vector<2x64xf32> -> vector<2x64xf32>
    %cst_8 = arith.constant 0.000000e+00 : f32
    %6 = vector.broadcast %cst_8 : f32 to vector<2x64xf32>
    %7 = tpu.concatenate %6, %5 in 1 : vector<2x64xf32>, vector<2x64xf32> -> vector<2x128xf32>
    %8 = arith.addf %3, %7 : vector<2x128xf32>
    %c0_9 = arith.constant 0 : index
    %c0_10 = arith.constant 0 : index
    %9 = vector.load %arg4[%c0_9, %c0_10] : memref<1x128xf32, #tpu.memory_space<vmem>>, vector<1x128xf32>
    %10 = vector.broadcast %9 : vector<1x128xf32> to vector<2x128xf32>
    %11 = arith.addf %8, %10 : vector<2x128xf32>
    %c0_11 = arith.constant 0 : index
    %c0_12 = arith.constant 0 : index
    %12 = vector.load %arg7[%c0_11, %c0_12] : memref<2x128xf32, #tpu.memory_space<vmem>>, vector<2x128xf32>
    tpu.vector_store %arg7[%c0_11, %c0_12], %11 {strides = array<i32>} : memref<2x128xf32, #tpu.memory_space<vmem>>, vector<2x128xf32>,
    %13 = vector.extract_strided_slice %11 {offsets = [0, 32], sizes = [2, 64], strides = [1, 1]} : vector<2x128xf32> to vector<2x64xf32>
    %14 = arith.truncf %13 : vector<2x64xf32> to vector<2x64xbf16>
    %c0_13 = arith.constant 0 : index
    %c0_14 = arith.constant 0 : index
    %15 = vector.load %arg5[%c0_13, %c0_14] : memref<64x1024xbf16, #tpu.memory_space<vmem>>, vector<64x1024xbf16>
    %cst_15 = arith.constant dense<0.000000e+00> : vector<2x1024xf32>
    %16 = tpu.matmul %14, %15, %cst_15 {dimension_numbers = #tpu.dot_dimension_numbers<[1], [0], [0], [1], [0, 0, 1, 1], [], []>} : vector<2x64xbf16>, vector<64x1024xbf16>, vector<2x1024xf32> -> vector<2x1024xf32>
    %c0_16 = arith.constant 0 : index
    %c0_17 = arith.constant 0 : index
    %17 = vector.load %arg6[%c0_16, %c0_17] : memref<1x1024xf32, #tpu.memory_space<vmem>>, vector<1x1024xf32>
    %18 = vector.broadcast %17 : vector<1x1024xf32> to vector<2x1024xf32>
    %19 = arith.addf %16, %18 : vector<2x1024xf32>
    %c0_18 = arith.constant 0 : index
    %c0_19 = arith.constant 0 : index
    %20 = vector.load %arg8[%c0_18, %c0_19] : memref<2x1024xf32, #tpu.memory_space<vmem>>, vector<2x1024xf32>
    tpu.vector_store %arg8[%c0_18, %c0_19], %19 {strides = array<i32>} : memref<2x1024xf32, #tpu.memory_space<vmem>>, vector<2x1024xf32>,
    return
  }
}

</mosaic_0001>

<llo_original>
// kernel: base_temp_model_forward.1
$region0: #{base_temp_model_forward.1}
  #allocation0 [shape = 'u32[]', space=smem, size = 0x4, offset = 0x4, fixed_abs, tag = 'smem constant byte address 0x4 - core index']
  #allocation1 [shape = 'u32[144,128]{1,0:T(1,128)}', space=vmem, size = 0x12000, scoped, tag = 'internal scratch']
  %s0 = inlined_call_operand.vmem [shape: bf16[2,1024], index: 0, kind: input, shape index: {}]
  %s1 = inlined_call_operand.vmem [shape: bf16[2,1024], index: 1, kind: input, shape index: {}]
  %s2 = inlined_call_operand.vmem [shape: bf16[1024,128], index: 2, kind: input, shape index: {}]
  %s3 = inlined_call_operand.vmem [shape: bf16[1024,64], index: 3, kind: input, shape index: {}]
  %s4 = inlined_call_operand.vmem [shape: f32[1,128], index: 4, kind: input, shape index: {}]
  %s5 = inlined_call_operand.vmem [shape: bf16[64,1024], index: 5, kind: input, shape index: {}]
  %s6 = inlined_call_operand.vmem [shape: f32[1,1024], index: 6, kind: input, shape index: {}]
  %s7 = inlined_call_operand.vmem [shape: f32[2,128], index: 7, kind: output, shape index: {0}]
  %s8 = inlined_call_operand.vmem [shape: f32[2,1024], index: 8, kind: output, shape index: {1}]
  %9 = xla_tuple %s7, %s8
  %s10 = sld [smem:[#allocation0]]
  $region46: #{base_temp_model_forward.1} parent=0
    _
  %s12 = ssub.s32 1, %s10
  %s13 = scalar_select 0, %s12, %s10
  // Predicated region
  $region2: #{base_temp_model_forward.1} parent=0 // pred_check
    _
  $region3: #{base_temp_model_forward.1} parent=0 // pred_check_branch
    %15 = sbr.rel (0) target = $region5
  $region4: #{base_temp_model_forward.1} parent=0 // pred_region
    _
  $region5: #{base_temp_model_forward.1} parent=0 // pred_fallthru
    _
  // Predicated region
  $region6: #{base_temp_model_forward.1} parent=0 // pred_check
    _
  $region7: #{base_temp_model_forward.1} parent=0 // pred_check_branch
    %17 = sbr.rel (0) target = $region9
  $region8: #{base_temp_model_forward.1} parent=0 // pred_region
    _
  $region9: #{base_temp_model_forward.1} parent=0 // pred_fallthru
    _
  // Predicated region
  $region10: #{base_temp_model_forward.1} parent=0 // pred_check
    _
  $region11: #{base_temp_model_forward.1} parent=0 // pred_check_branch
    %19 = sbr.rel (0) target = $region13
  $region12: #{base_temp_model_forward.1} parent=0 // pred_region
    _
  $region13: #{base_temp_model_forward.1} parent=0 // pred_fallthru
    _
  // Predicated region
  $region14: #{base_temp_model_forward.1} parent=0 // pred_check
    _
  $region15: #{base_temp_model_forward.1} parent=0 // pred_check_branch
    %21 = sbr.rel (0) target = $region17
  $region16: #{base_temp_model_forward.1} parent=0 // pred_region
    _
  $region17: #{base_temp_model_forward.1} parent=0 // pred_fallthru
    _
  // Predicated region
  $region18: #{base_temp_model_forward.1} parent=0 // pred_check
    _
  $region19: #{base_temp_model_forward.1} parent=0 // pred_check_branch
    %23 = sbr.rel (0) target = $region21
  $region20: #{base_temp_model_forward.1} parent=0 // pred_region
    _
  $region21: #{base_temp_model_forward.1} parent=0 // pred_fallthru
    _
  // Predicated region
  $region22: #{base_temp_model_forward.1} parent=0 // pred_check
    _
  $region23: #{base_temp_model_forward.1} parent=0 // pred_check_branch
    %25 = sbr.rel (0) target = $region25
  $region24: #{base_temp_model_forward.1} parent=0 // pred_region
    _
  $region25: #{base_temp_model_forward.1} parent=0 // pred_fallthru
    _
  // Predicated region
  $region26: #{base_temp_model_forward.1} parent=0 // pred_check
    _
  $region27: #{base_temp_model_forward.1} parent=0 // pred_check_branch
    %27 = sbr.rel (0) target = $region29
  $region28: #{base_temp_model_forward.1} parent=0 // pred_region
    _
  $region29: #{base_temp_model_forward.1} parent=0 // pred_fallthru
    _
  %v29 = vld [vmem:[%s0] sm:$0xff]
  %v30 = vld [vmem:[%s1] sm:$0xff]
  %v31 = vld [vmem:[%s2] sm:$0xf]
  %v32 = vld [vmem:[%s2 + $0x4] sm:$0xf]
  %v33 = vld [vmem:[%s2 + $0x8] sm:$0xf]
  %v34 = vld [vmem:[%s2 + $0xc] sm:$0xf]
  %v35 = vld [vmem:[%s2 + $0x10] sm:$0xf]
  %v36 = vld [vmem:[%s2 + $0x14] sm:$0xf]
  %v37 = vld [vmem:[%s2 + $0x18] sm:$0xf]
  %v38 = vld [vmem:[%s2 + $0x1c] sm:$0xf]
  %v39 = vld [vmem:[%s2 + $0x20] sm:$0xf]
  %v40 = vld [vmem:[%s2 + $0x24] sm:$0xf]
  %v41 = vld [vmem:[%s2 + $0x28] sm:$0xf]
  %v42 = vld [vmem:[%s2 + $0x2c] sm:$0xf]
  %v43 = vld [vmem:[%s2 + $0x30] sm:$0xf]
  %v44 = vld [vmem:[%s2 + $0x34] sm:$0xf]
  %v45 = vld [vmem:[%s2 + $0x38] sm:$0xf]
  %v46 = vld [vmem:[%s2 + $0x3c] sm:$0xf]
  %v47 = vld [vmem:[%s2 + $0x40] sm:$0xf]
  %v48 = vld [vmem:[%s2 + $0x44] sm:$0xf]
  %v49 = vld [vmem:[%s2 + $0x48] sm:$0xf]
  %v50 = vld [vmem:[%s2 + $0x4c] sm:$0xf]
  %v51 = vld [vmem:[%s2 + $0x50] sm:$0xf]
  %v52 = vld [vmem:[%s2 + $0x54] sm:$0xf]
  %v53 = vld [vmem:[%s2 + $0x58] sm:$0xf]
  %v54 = vld [vmem:[%s2 + $0x5c] sm:$0xf]
  %v55 = vld [vmem:[%s2 + $0x60] sm:$0xf]
  %v56 = vld [vmem:[%s2 + $0x64] sm:$0xf]
  %v57 = vld [vmem:[%s2 + $0x68] sm:$0xf]
  %v58 = vld [vmem:[%s2 + $0x6c] sm:$0xf]
  %v59 = vld [vmem:[%s2 + $0x70] sm:$0xf]
  %v60 = vld [vmem:[%s2 + $0x74] sm:$0xf]
  %v61 = vld [vmem:[%s2 + $0x78] sm:$0xf]
  %v62 = vld [vmem:[%s2 + $0x7c] sm:$0xf]
  %v63 = vld [vmem:[%s2 + $0x80] sm:$0xf]
  %v64 = vld [vmem:[%s2 + $0x84] sm:$0xf]
  %v65 = vld [vmem:[%s2 + $0x88] sm:$0xf]
  %v66 = vld [vmem:[%s2 + $0x8c] sm:$0xf]
  %v67 = vld [vmem:[%s2 + $0x90] sm:$0xf]
  %v68 = vld [vmem:[%s2 + $0x94] sm:$0xf]
  %v69 = vld [vmem:[%s2 + $0x98] sm:$0xf]
  %v70 = vld [vmem:[%s2 + $0x9c] sm:$0xf]
  %v71 = vld [vmem:[%s2 + $0xa0] sm:$0xf]
  %v72 = vld [vmem:[%s2 + $0xa4] sm:$0xf]
  %v73 = vld [vmem:[%s2 + $0xa8] sm:$0xf]
  %v74 = vld [vmem:[%s2 + $0xac] sm:$0xf]
  %v75 = vld [vmem:[%s2 + $0xb0] sm:$0xf]
  %v76 = vld [vmem:[%s2 + $0xb4] sm:$0xf]
  %v77 = vld [vmem:[%s2 + $0xb8] sm:$0xf]
  %v78 = vld [vmem:[%s2 + $0xbc] sm:$0xf]
  %v79 = vld [vmem:[%s2 + $0xc0] sm:$0xf]
  %v80 = vld [vmem:[%s2 + $0xc4] sm:$0xf]
  %v81 = vld [vmem:[%s2 + $0xc8] sm:$0xf]
  %v82 = vld [vmem:[%s2 + $0xcc] sm:$0xf]
  %v83 = vld [vmem:[%s2 + $0xd0] sm:$0xf]
  %v84 = vld [vmem:[%s2 + $0xd4] sm:$0xf]
  %v85 = vld [vmem:[%s2 + $0xd8] sm:$0xf]
  %v86 = vld [vmem:[%s2 + $0xdc] sm:$0xf]
  %v87 = vld [vmem:[%s2 + $0xe0] sm:$0xf]
  %v88 = vld [vmem:[%s2 + $0xe4] sm:$0xf]
  %v89 = vld [vmem:[%s2 + $0xe8] sm:$0xf]
  %v90 = vld [vmem:[%s2 + $0xec] sm:$0xf]
  %v91 = vld [vmem:[%s2 + $0xf0] sm:$0xf]
  %v92 = vld [vmem:[%s2 + $0xf4] sm:$0xf]
  %v93 = vld [vmem:[%s2 + $0xf8] sm:$0xf]
  %v94 = vld [vmem:[%s2 + $0xfc] sm:$0xf]
  %v95 = vld [vmem:[%s2 + $0x100] sm:$0xf]
  %v96 = vld [vmem:[%s2 + $0x104] sm:$0xf]
  %v97 = vld [vmem:[%s2 + $0x108] sm:$0xf]
  %v98 = vld [vmem:[%s2 + $0x10c] sm:$0xf]
  %v99 = vld [vmem:[%s2 + $0x110] sm:$0xf]
  %v100 = vld [vmem:[%s2 + $0x114] sm:$0xf]
  %v101 = vld [vmem:[%s2 + $0x118] sm:$0xf]
  %v102 = vld [vmem:[%s2 + $0x11c] sm:$0xf]
  %v103 = vld [vmem:[%s2 + $0x120] sm:$0xf]
  %v104 = vld [vmem:[%s2 + $0x124] sm:$0xf]
  %v105 = vld [vmem:[%s2 + $0x128] sm:$0xf]
  %v106 = vld [vmem:[%s2 + $0x12c] sm:$0xf]
  %v107 = vld [vmem:[%s2 + $0x130] sm:$0xf]
  %v108 = vld [vmem:[%s2 + $0x134] sm:$0xf]
  %v109 = vld [vmem:[%s2 + $0x138] sm:$0xf]
  %v110 = vld [vmem:[%s2 + $0x13c] sm:$0xf]
  %v111 = vld [vmem:[%s2 + $0x140] sm:$0xf]
  %v112 = vld [vmem:[%s2 + $0x144] sm:$0xf]
  %v113 = vld [vmem:[%s2 + $0x148] sm:$0xf]
  %v114 = vld [vmem:[%s2 + $0x14c] sm:$0xf]
  %v115 = vld [vmem:[%s2 + $0x150] sm:$0xf]
  %v116 = vld [vmem:[%s2 + $0x154] sm:$0xf]
  %v117 = vld [vmem:[%s2 + $0x158] sm:$0xf]
  %v118 = vld [vmem:[%s2 + $0x15c] sm:$0xf]
  %v119 = vld [vmem:[%s2 + $0x160] sm:$0xf]
  %v120 = vld [vmem:[%s2 + $0x164] sm:$0xf]
  %v121 = vld [vmem:[%s2 + $0x168] sm:$0xf]
  %v122 = vld [vmem:[%s2 + $0x16c] sm:$0xf]
  %v123 = vld [vmem:[%s2 + $0x170] sm:$0xf]
  %v124 = vld [vmem:[%s2 + $0x174] sm:$0xf]
  %v125 = vld [vmem:[%s2 + $0x178] sm:$0xf]
  %v126 = vld [vmem:[%s2 + $0x17c] sm:$0xf]
  %v127 = vld [vmem:[%s2 + $0x180] sm:$0xf]
  %v128 = vld [vmem:[%s2 + $0x184] sm:$0xf]
  %v129 = vld [vmem:[%s2 + $0x188] sm:$0xf]
  %v130 = vld [vmem:[%s2 + $0x18c] sm:$0xf]
  %v131 = vld [vmem:[%s2 + $0x190] sm:$0xf]
  %v132 = vld [vmem:[%s2 + $0x194] sm:$0xf]
  %v133 = vld [vmem:[%s2 + $0x198] sm:$0xf]
  %v134 = vld [vmem:[%s2 + $0x19c] sm:$0xf]
  %v135 = vld [vmem:[%s2 + $0x1a0] sm:$0xf]
  %v136 = vld [vmem:[%s2 + $0x1a4] sm:$0xf]
  %v137 = vld [vmem:[%s2 + $0x1a8] sm:$0xf]
  %v138 = vld [vmem:[%s2 + $0x1ac] sm:$0xf]
  %v139 = vld [vmem:[%s2 + $0x1b0] sm:$0xf]
  %v140 = vld [vmem:[%s2 + $0x1b4] sm:$0xf]
  %v141 = vld [vmem:[%s2 + $0x1b8] sm:$0xf]
  %v142 = vld [vmem:[%s2 + $0x1bc] sm:$0xf]
  %v143 = vld [vmem:[%s2 + $0x1c0] sm:$0xf]
  %v144 = vld [vmem:[%s2 + $0x1c4] sm:$0xf]
  %v145 = vld [vmem:[%s2 + $0x1c8] sm:$0xf]
  %v146 = vld [vmem:[%s2 + $0x1cc] sm:$0xf]
  %v147 = vld [vmem:[%s2 + $0x1d0] sm:$0xf]
  %v148 = vld [vmem:[%s2 + $0x1d4] sm:$0xf]
  %v149 = vld [vmem:[%s2 + $0x1d8] sm:$0xf]
  %v150 = vld [vmem:[%s2 + $0x1dc] sm:$0xf]
  %v151 = vld [vmem:[%s2 + $0x1e0] sm:$0xf]
  %v152 = vld [vmem:[%s2 + $0x1e4] sm:$0xf]
  %v153 = vld [vmem:[%s2 + $0x1e8] sm:$0xf]
  %v154 = vld [vmem:[%s2 + $0x1ec] sm:$0xf]
  %v155 = vld [vmem:[%s2 + $0x1f0] sm:$0xf]
  %v156 = vld [vmem:[%s2 + $0x1f4] sm:$0xf]
  %v157 = vld [vmem:[%s2 + $0x1f8] sm:$0xf]
  %v158 = vld [vmem:[%s2 + $0x1fc] sm:$0xf]
  %v159 = vld [vmem:[%s3] sm:$0xf]
  %v160 = vld [vmem:[%s3 + $0x4] sm:$0xf]
  %v161 = vld [vmem:[%s3 + $0x8] sm:$0xf]
  %v162 = vld [vmem:[%s3 + $0xc] sm:$0xf]
  %v163 = vld [vmem:[%s3 + $0x10] sm:$0xf]
  %v164 = vld [vmem:[%s3 + $0x14] sm:$0xf]
  %v165 = vld [vmem:[%s3 + $0x18] sm:$0xf]
  %v166 = vld [vmem:[%s3 + $0x1c] sm:$0xf]
  %v167 = vld [vmem:[%s3 + $0x20] sm:$0xf]
  %v168 = vld [vmem:[%s3 + $0x24] sm:$0xf]
  %v169 = vld [vmem:[%s3 + $0x28] sm:$0xf]
  %v170 = vld [vmem:[%s3 + $0x2c] sm:$0xf]
  %v171 = vld [vmem:[%s3 + $0x30] sm:$0xf]
  %v172 = vld [vmem:[%s3 + $0x34] sm:$0xf]
  %v173 = vld [vmem:[%s3 + $0x38] sm:$0xf]
  %v174 = vld [vmem:[%s3 + $0x3c] sm:$0xf]
  %v175 = vld [vmem:[%s3 + $0x40] sm:$0xf]
  %v176 = vld [vmem:[%s3 + $0x44] sm:$0xf]
  %v177 = vld [vmem:[%s3 + $0x48] sm:$0xf]
  %v178 = vld [vmem:[%s3 + $0x4c] sm:$0xf]
  %v179 = vld [vmem:[%s3 + $0x50] sm:$0xf]
  %v180 = vld [vmem:[%s3 + $0x54] sm:$0xf]
  %v181 = vld [vmem:[%s3 + $0x58] sm:$0xf]
  %v182 = vld [vmem:[%s3 + $0x5c] sm:$0xf]
  %v183 = vld [vmem:[%s3 + $0x60] sm:$0xf]
  %v184 = vld [vmem:[%s3 + $0x64] sm:$0xf]
  %v185 = vld [vmem:[%s3 + $0x68] sm:$0xf]
  %v186 = vld [vmem:[%s3 + $0x6c] sm:$0xf]
  %v187 = vld [vmem:[%s3 + $0x70] sm:$0xf]
  %v188 = vld [vmem:[%s3 + $0x74] sm:$0xf]
  %v189 = vld [vmem:[%s3 + $0x78] sm:$0xf]
  %v190 = vld [vmem:[%s3 + $0x7c] sm:$0xf]
  %v191 = vld [vmem:[%s3 + $0x80] sm:$0xf]
  %v192 = vld [vmem:[%s3 + $0x84] sm:$0xf]
  %v193 = vld [vmem:[%s3 + $0x88] sm:$0xf]
  %v194 = vld [vmem:[%s3 + $0x8c] sm:$0xf]
  %v195 = vld [vmem:[%s3 + $0x90] sm:$0xf]
  %v196 = vld [vmem:[%s3 + $0x94] sm:$0xf]
  %v197 = vld [vmem:[%s3 + $0x98] sm:$0xf]
  %v198 = vld [vmem:[%s3 + $0x9c] sm:$0xf]
  %v199 = vld [vmem:[%s3 + $0xa0] sm:$0xf]
  %v200 = vld [vmem:[%s3 + $0xa4] sm:$0xf]
  %v201 = vld [vmem:[%s3 + $0xa8] sm:$0xf]
  %v202 = vld [vmem:[%s3 + $0xac] sm:$0xf]
  %v203 = vld [vmem:[%s3 + $0xb0] sm:$0xf]
  %v204 = vld [vmem:[%s3 + $0xb4] sm:$0xf]
  %v205 = vld [vmem:[%s3 + $0xb8] sm:$0xf]
  %v206 = vld [vmem:[%s3 + $0xbc] sm:$0xf]
  %v207 = vld [vmem:[%s3 + $0xc0] sm:$0xf]
  %v208 = vld [vmem:[%s3 + $0xc4] sm:$0xf]
  %v209 = vld [vmem:[%s3 + $0xc8] sm:$0xf]
  %v210 = vld [vmem:[%s3 + $0xcc] sm:$0xf]
  %v211 = vld [vmem:[%s3 + $0xd0] sm:$0xf]
  %v212 = vld [vmem:[%s3 + $0xd4] sm:$0xf]
  %v213 = vld [vmem:[%s3 + $0xd8] sm:$0xf]
  %v214 = vld [vmem:[%s3 + $0xdc] sm:$0xf]
  %v215 = vld [vmem:[%s3 + $0xe0] sm:$0xf]
  %v216 = vld [vmem:[%s3 + $0xe4] sm:$0xf]
  %v217 = vld [vmem:[%s3 + $0xe8] sm:$0xf]
  %v218 = vld [vmem:[%s3 + $0xec] sm:$0xf]
  %v219 = vld [vmem:[%s3 + $0xf0] sm:$0xf]
  %v220 = vld [vmem:[%s3 + $0xf4] sm:$0xf]
  %v221 = vld [vmem:[%s3 + $0xf8] sm:$0xf]
  %v222 = vld [vmem:[%s3 + $0xfc] sm:$0xf]
  %v223 = vld [vmem:[%s3 + $0x100] sm:$0xf]
  %v224 = vld [vmem:[%s3 + $0x104] sm:$0xf]
  %v225 = vld [vmem:[%s3 + $0x108] sm:$0xf]
  %v226 = vld [vmem:[%s3 + $0x10c] sm:$0xf]
  %v227 = vld [vmem:[%s3 + $0x110] sm:$0xf]
  %v228 = vld [vmem:[%s3 + $0x114] sm:$0xf]
  %v229 = vld [vmem:[%s3 + $0x118] sm:$0xf]
  %v230 = vld [vmem:[%s3 + $0x11c] sm:$0xf]
  %v231 = vld [vmem:[%s3 + $0x120] sm:$0xf]
  %v232 = vld [vmem:[%s3 + $0x124] sm:$0xf]
  %v233 = vld [vmem:[%s3 + $0x128] sm:$0xf]
  %v234 = vld [vmem:[%s3 + $0x12c] sm:$0xf]
  %v235 = vld [vmem:[%s3 + $0x130] sm:$0xf]
  %v236 = vld [vmem:[%s3 + $0x134] sm:$0xf]
  %v237 = vld [vmem:[%s3 + $0x138] sm:$0xf]
  %v238 = vld [vmem:[%s3 + $0x13c] sm:$0xf]
  %v239 = vld [vmem:[%s3 + $0x140] sm:$0xf]
  %v240 = vld [vmem:[%s3 + $0x144] sm:$0xf]
  %v241 = vld [vmem:[%s3 + $0x148] sm:$0xf]
  %v242 = vld [vmem:[%s3 + $0x14c] sm:$0xf]
  %v243 = vld [vmem:[%s3 + $0x150] sm:$0xf]
  %v244 = vld [vmem:[%s3 + $0x154] sm:$0xf]
  %v245 = vld [vmem:[%s3 + $0x158] sm:$0xf]
  %v246 = vld [vmem:[%s3 + $0x15c] sm:$0xf]
  %v247 = vld [vmem:[%s3 + $0x160] sm:$0xf]
  %v248 = vld [vmem:[%s3 + $0x164] sm:$0xf]
  %v249 = vld [vmem:[%s3 + $0x168] sm:$0xf]
  %v250 = vld [vmem:[%s3 + $0x16c] sm:$0xf]
  %v251 = vld [vmem:[%s3 + $0x170] sm:$0xf]
  %v252 = vld [vmem:[%s3 + $0x174] sm:$0xf]
  %v253 = vld [vmem:[%s3 + $0x178] sm:$0xf]
  %v254 = vld [vmem:[%s3 + $0x17c] sm:$0xf]
  %v255 = vld [vmem:[%s3 + $0x180] sm:$0xf]
  %v256 = vld [vmem:[%s3 + $0x184] sm:$0xf]
  %v257 = vld [vmem:[%s3 + $0x188] sm:$0xf]
  %v258 = vld [vmem:[%s3 + $0x18c] sm:$0xf]
  %v259 = vld [vmem:[%s3 + $0x190] sm:$0xf]
  %v260 = vld [vmem:[%s3 + $0x194] sm:$0xf]
  %v261 = vld [vmem:[%s3 + $0x198] sm:$0xf]
  %v262 = vld [vmem:[%s3 + $0x19c] sm:$0xf]
  %v263 = vld [vmem:[%s3 + $0x1a0] sm:$0xf]
  %v264 = vld [vmem:[%s3 + $0x1a4] sm:$0xf]
  %v265 = vld [vmem:[%s3 + $0x1a8] sm:$0xf]
  %v266 = vld [vmem:[%s3 + $0x1ac] sm:$0xf]
  %v267 = vld [vmem:[%s3 + $0x1b0] sm:$0xf]
  %v268 = vld [vmem:[%s3 + $0x1b4] sm:$0xf]
  %v269 = vld [vmem:[%s3 + $0x1b8] sm:$0xf]
  %v270 = vld [vmem:[%s3 + $0x1bc] sm:$0xf]
  %v271 = vld [vmem:[%s3 + $0x1c0] sm:$0xf]
  %v272 = vld [vmem:[%s3 + $0x1c4] sm:$0xf]
  %v273 = vld [vmem:[%s3 + $0x1c8] sm:$0xf]
  %v274 = vld [vmem:[%s3 + $0x1cc] sm:$0xf]
  %v275 = vld [vmem:[%s3 + $0x1d0] sm:$0xf]
  %v276 = vld [vmem:[%s3 + $0x1d4] sm:$0xf]
  %v277 = vld [vmem:[%s3 + $0x1d8] sm:$0xf]
  %v278 = vld [vmem:[%s3 + $0x1dc] sm:$0xf]
  %v279 = vld [vmem:[%s3 + $0x1e0] sm:$0xf]
  %v280 = vld [vmem:[%s3 + $0x1e4] sm:$0xf]
  %v281 = vld [vmem:[%s3 + $0x1e8] sm:$0xf]
  %v282 = vld [vmem:[%s3 + $0x1ec] sm:$0xf]
  %v283 = vld [vmem:[%s3 + $0x1f0] sm:$0xf]
  %v284 = vld [vmem:[%s3 + $0x1f4] sm:$0xf]
  %v285 = vld [vmem:[%s3 + $0x1f8] sm:$0xf]
  %v286 = vld [vmem:[%s3 + $0x1fc] sm:$0xf]
  %v288 = vcombine.high %v30, %v30
  %v290 = vunpack.c.l.s4 1966171168
  %v291 = vunpack.c.0.s8 %v290
  %v292 = vlaneseq
  %v293 = vshrl.u32 %v292, 7
  %v294 = vsub.s32 %v291, %v293
  %v295 = vrot.slane %v30, %v294
  %v297 = vunpack.c.l.s4 1966171168
  %v298 = vunpack.c.0.s8 %v297
  %v299 = vlaneseq
  %v300 = vshrl.u32 %v299, 7
  %v301 = vsub.s32 %v298, %v300
  %v302 = vrot.slane %v288, %v301
  %v303 = vcombine.high %v295, %v295
  %v304 = vcombine.high %v302, %v302
  %v306 = vunpack.c.l.s4 1966171168
  %v307 = vunpack.c.0.s8 %v306
  %v308 = vlaneseq
  %v309 = vshrl.u32 %v308, 7
  %v310 = vsub.s32 %v307, %v309
  %v311 = vrot.slane %v295, %v310
  %v313 = vunpack.c.l.s4 1966171168
  %v314 = vunpack.c.0.s8 %v313
  %v315 = vlaneseq
  %v316 = vshrl.u32 %v315, 7
  %v317 = vsub.s32 %v314, %v316
  %v318 = vrot.slane %v302, %v317
  %v320 = vunpack.c.l.s4 1966171168
  %v321 = vunpack.c.0.s8 %v320
  %v322 = vlaneseq
  %v323 = vshrl.u32 %v322, 7
  %v324 = vsub.s32 %v321, %v323
  %v325 = vrot.slane %v303, %v324
  %v327 = vunpack.c.l.s4 1966171168
  %v328 = vunpack.c.0.s8 %v327
  %v329 = vlaneseq
  %v330 = vshrl.u32 %v329, 7
  %v331 = vsub.s32 %v328, %v330
  %v332 = vrot.slane %v304, %v331
  %v333 = vcombine.high %v311, %v311
  %v334 = vcombine.high %v318, %v318
  %v335 = vcombine.high %v325, %v325
  %v336 = vcombine.high %v332, %v332
  %v473 = vunpack.c.l.b16 %v159
  %v474 = vunpack.c.l.b16 %v160
  %v475 = vunpack.c.l.b16 %v161
  %v476 = vunpack.c.l.b16 %v162
  %v477 = vunpack.c.l.b16 %v163
  %v478 = vunpack.c.l.b16 %v164
  %v479 = vunpack.c.l.b16 %v165
  %v480 = vunpack.c.l.b16 %v166
  %v481 = vunpack.c.l.b16 %v167
  %v482 = vunpack.c.l.b16 %v168
  %v483 = vunpack.c.l.b16 %v169
  %v484 = vunpack.c.l.b16 %v170
  %v485 = vunpack.c.l.b16 %v171
  %v486 = vunpack.c.l.b16 %v172
  %v487 = vunpack.c.l.b16 %v173
  %v488 = vunpack.c.l.b16 %v174
  %v489 = vunpack.c.l.b16 %v175
  %v490 = vunpack.c.l.b16 %v176
  %v491 = vunpack.c.l.b16 %v177
  %v492 = vunpack.c.l.b16 %v178
  %v493 = vunpack.c.l.b16 %v179
  %v494 = vunpack.c.l.b16 %v180
  %v495 = vunpack.c.l.b16 %v181
  %v496 = vunpack.c.l.b16 %v182
  %v497 = vunpack.c.l.b16 %v183
  %v498 = vunpack.c.l.b16 %v184
  %v499 = vunpack.c.l.b16 %v185
  %v500 = vunpack.c.l.b16 %v186
  %v501 = vunpack.c.l.b16 %v187
  %v502 = vunpack.c.l.b16 %v188
  %v503 = vunpack.c.l.b16 %v189
  %v504 = vunpack.c.l.b16 %v190
  %v505 = vunpack.c.l.b16 %v191
  %v506 = vunpack.c.l.b16 %v192
  %v507 = vunpack.c.l.b16 %v193
  %v508 = vunpack.c.l.b16 %v194
  %v509 = vunpack.c.l.b16 %v195
  %v510 = vunpack.c.l.b16 %v196
  %v511 = vunpack.c.l.b16 %v197
  %v512 = vunpack.c.l.b16 %v198
  %v513 = vunpack.c.l.b16 %v199
  %v514 = vunpack.c.l.b16 %v200
  %v515 = vunpack.c.l.b16 %v201
  %v516 = vunpack.c.l.b16 %v202
  %v517 = vunpack.c.l.b16 %v203
  %v518 = vunpack.c.l.b16 %v204
  %v519 = vunpack.c.l.b16 %v205
  %v520 = vunpack.c.l.b16 %v206
  %v521 = vunpack.c.l.b16 %v207
  %v522 = vunpack.c.l.b16 %v208
  %v523 = vunpack.c.l.b16 %v209
  %v524 = vunpack.c.l.b16 %v210
  %v525 = vunpack.c.l.b16 %v211
  %v526 = vunpack.c.l.b16 %v212
  %v527 = vunpack.c.l.b16 %v213
  %v528 = vunpack.c.l.b16 %v214
  %v529 = vunpack.c.l.b16 %v215
  %v530 = vunpack.c.l.b16 %v216
  %v531 = vunpack.c.l.b16 %v217
  %v532 = vunpack.c.l.b16 %v218
  %v533 = vunpack.c.l.b16 %v219
  %v534 = vunpack.c.l.b16 %v220
  %v535 = vunpack.c.l.b16 %v221
  %v536 = vunpack.c.l.b16 %v222
  %v537 = vunpack.c.l.b16 %v223
  %v538 = vunpack.c.l.b16 %v224
  %v539 = vunpack.c.l.b16 %v225
  %v540 = vunpack.c.l.b16 %v226
  %v541 = vunpack.c.l.b16 %v227
  %v542 = vunpack.c.l.b16 %v228
  %v543 = vunpack.c.l.b16 %v229
  %v544 = vunpack.c.l.b16 %v230
  %v545 = vunpack.c.l.b16 %v231
  %v546 = vunpack.c.l.b16 %v232
  %v547 = vunpack.c.l.b16 %v233
  %v548 = vunpack.c.l.b16 %v234
  %v549 = vunpack.c.l.b16 %v235
  %v550 = vunpack.c.l.b16 %v236
  %v551 = vunpack.c.l.b16 %v237
  %v552 = vunpack.c.l.b16 %v238
  %v553 = vunpack.c.l.b16 %v239
  %v554 = vunpack.c.l.b16 %v240
  %v555 = vunpack.c.l.b16 %v241
  %v556 = vunpack.c.l.b16 %v242
  %v557 = vunpack.c.l.b16 %v243
  %v558 = vunpack.c.l.b16 %v244
  %v559 = vunpack.c.l.b16 %v245
  %v560 = vunpack.c.l.b16 %v246
  %v561 = vunpack.c.l.b16 %v247
  %v562 = vunpack.c.l.b16 %v248
  %v563 = vunpack.c.l.b16 %v249
  %v564 = vunpack.c.l.b16 %v250
  %v565 = vunpack.c.l.b16 %v251
  %v566 = vunpack.c.l.b16 %v252
  %v567 = vunpack.c.l.b16 %v253
  %v568 = vunpack.c.l.b16 %v254
  %v569 = vunpack.c.l.b16 %v255
  %v570 = vunpack.c.l.b16 %v256
  %v571 = vunpack.c.l.b16 %v257
  %v572 = vunpack.c.l.b16 %v258
  %v573 = vunpack.c.l.b16 %v259
  %v574 = vunpack.c.l.b16 %v260
  %v575 = vunpack.c.l.b16 %v261
  %v576 = vunpack.c.l.b16 %v262
  %v577 = vunpack.c.l.b16 %v263
  %v578 = vunpack.c.l.b16 %v264
  %v579 = vunpack.c.l.b16 %v265
  %v580 = vunpack.c.l.b16 %v266
  %v581 = vunpack.c.l.b16 %v267
  %v582 = vunpack.c.l.b16 %v268
  %v583 = vunpack.c.l.b16 %v269
  %v584 = vunpack.c.l.b16 %v270
  %v585 = vunpack.c.l.b16 %v271
  %v586 = vunpack.c.l.b16 %v272
  %v587 = vunpack.c.l.b16 %v273
  %v588 = vunpack.c.l.b16 %v274
  %v589 = vunpack.c.l.b16 %v275
  %v590 = vunpack.c.l.b16 %v276
  %v591 = vunpack.c.l.b16 %v277
  %v592 = vunpack.c.l.b16 %v278
  %v593 = vunpack.c.l.b16 %v279
  %v594 = vunpack.c.l.b16 %v280
  %v595 = vunpack.c.l.b16 %v281
  %v596 = vunpack.c.l.b16 %v282
  %v597 = vunpack.c.l.b16 %v283
  %v598 = vunpack.c.l.b16 %v284
  %v599 = vunpack.c.l.b16 %v285
  %v600 = vunpack.c.l.b16 %v286
  %v601 = vpack.c.b16 %v474, %v473
  %v602 = vpack.c.b16 %v476, %v475
  %v603 = vpack.c.b16 %v478, %v477
  %v604 = vpack.c.b16 %v480, %v479
  %v605 = vpack.c.b16 %v482, %v481
  %v606 = vpack.c.b16 %v484, %v483
  %v607 = vpack.c.b16 %v486, %v485
  %v608 = vpack.c.b16 %v488, %v487
  %v609 = vpack.c.b16 %v490, %v489
  %v610 = vpack.c.b16 %v492, %v491
  %v611 = vpack.c.b16 %v494, %v493
  %v612 = vpack.c.b16 %v496, %v495
  %v613 = vpack.c.b16 %v498, %v497
  %v614 = vpack.c.b16 %v500, %v499
  %v615 = vpack.c.b16 %v502, %v501
  %v616 = vpack.c.b16 %v504, %v503
  %v617 = vpack.c.b16 %v506, %v505
  %v618 = vpack.c.b16 %v508, %v507
  %v619 = vpack.c.b16 %v510, %v509
  %v620 = vpack.c.b16 %v512, %v511
  %v621 = vpack.c.b16 %v514, %v513
  %v622 = vpack.c.b16 %v516, %v515
  %v623 = vpack.c.b16 %v518, %v517
  %v624 = vpack.c.b16 %v520, %v519
  %v625 = vpack.c.b16 %v522, %v521
  %v626 = vpack.c.b16 %v524, %v523
  %v627 = vpack.c.b16 %v526, %v525
  %v628 = vpack.c.b16 %v528, %v527
  %v629 = vpack.c.b16 %v530, %v529
  %v630 = vpack.c.b16 %v532, %v531
  %v631 = vpack.c.b16 %v534, %v533
  %v632 = vpack.c.b16 %v536, %v535
  %v633 = vpack.c.b16 %v538, %v537
  %v634 = vpack.c.b16 %v540, %v539
  %v635 = vpack.c.b16 %v542, %v541
  %v636 = vpack.c.b16 %v544, %v543
  %v637 = vpack.c.b16 %v546, %v545
  %v638 = vpack.c.b16 %v548, %v547
  %v639 = vpack.c.b16 %v550, %v549
  %v640 = vpack.c.b16 %v552, %v551
  %v641 = vpack.c.b16 %v554, %v553
  %v642 = vpack.c.b16 %v556, %v555
  %v643 = vpack.c.b16 %v558, %v557
  %v644 = vpack.c.b16 %v560, %v559
  %v645 = vpack.c.b16 %v562, %v561
  %v646 = vpack.c.b16 %v564, %v563
  %v647 = vpack.c.b16 %v566, %v565
  %v648 = vpack.c.b16 %v568, %v567
  %v649 = vpack.c.b16 %v570, %v569
  %v650 = vpack.c.b16 %v572, %v571
  %v651 = vpack.c.b16 %v574, %v573
  %v652 = vpack.c.b16 %v576, %v575
  %v653 = vpack.c.b16 %v578, %v577
  %v654 = vpack.c.b16 %v580, %v579
  %v655 = vpack.c.b16 %v582, %v581
  %v656 = vpack.c.b16 %v584, %v583
  %v657 = vpack.c.b16 %v586, %v585
  %v658 = vpack.c.b16 %v588, %v587
  %v659 = vpack.c.b16 %v590, %v589
  %v660 = vpack.c.b16 %v592, %v591
  %v661 = vpack.c.b16 %v594, %v593
  %v662 = vpack.c.b16 %v596, %v595
  %v663 = vpack.c.b16 %v598, %v597
  %v664 = vpack.c.b16 %v600, %v599
  %729 = vmatprep.subr.bf16.mxu0 0
  %730 = vmatpush1.bf16.msra.mxu0 %v608
  %731 = vmatprep.subr.bf16.mxu0 0
  %732 = vmatpush1.bf16.msra.mxu0 %v607
  %733 = vmatprep.subr.bf16.mxu0 0
  %734 = vmatpush1.bf16.msra.mxu0 %v606
  %735 = vmatprep.subr.bf16.mxu0 0
  %736 = vmatpush1.bf16.msra.mxu0 %v605
  %737 = vmatprep.subr.bf16.mxu0 0
  %738 = vmatpush1.bf16.msra.mxu0 %v604
  %739 = vmatprep.subr.bf16.mxu0 0
  %740 = vmatpush1.bf16.msra.mxu0 %v603
  %741 = vmatprep.subr.bf16.mxu0 0
  %742 = vmatpush1.bf16.msra.mxu0 %v602
  %743 = vmatprep.subr.bf16.mxu0 0
  %744 = vmatpush1.bf16.msra.mxu0 %v601
  %745 = vmatprep.subr.bf16.mxu0 0
  %746 = vmatpush2.bf16.msra.mxu0 %v616
  %747 = vmatprep.subr.bf16.mxu0 0
  %748 = vmatpush2.bf16.msra.mxu0 %v615
  %749 = vmatprep.subr.bf16.mxu0 0
  %750 = vmatpush2.bf16.msra.mxu0 %v614
  %751 = vmatprep.subr.bf16.mxu0 0
  %752 = vmatpush2.bf16.msra.mxu0 %v613
  %753 = vmatprep.subr.bf16.mxu0 0
  %754 = vmatpush2.bf16.msra.mxu0 %v612
  %755 = vmatprep.subr.bf16.mxu0 0
  %756 = vmatpush2.bf16.msra.mxu0 %v611
  %757 = vmatprep.subr.bf16.mxu0 0
  %758 = vmatpush2.bf16.msra.mxu0 %v610
  %759 = vmatprep.subr.bf16.mxu0 0
  %760 = vmatpush2.bf16.msra.mxu0 %v609
  %761 = vmatprep.mubr.bf16.mxu0 %v325
  %762 = vmatmul.mubr.bf16.gmra.mxu0 %v311
  %v763 = vpop.f32.mrf.mxu0
  %v764 = vadd.f32 0.0, %v763
  %v765 = vpop.f32.mrf.mxu0
  %v766 = vpop.f32.mrf.mxu0
  %v767 = vpop.f32.mrf.mxu0
  %768 = vdwg.mxu0
  %769 = vmatprep.subr.bf16.mxu0 0
  %770 = vmatpush1.bf16.msra.mxu0 %v624
  %771 = vmatprep.subr.bf16.mxu0 0
  %772 = vmatpush1.bf16.msra.mxu0 %v623
  %773 = vmatprep.subr.bf16.mxu0 0
  %774 = vmatpush1.bf16.msra.mxu0 %v622
  %775 = vmatprep.subr.bf16.mxu0 0
  %776 = vmatpush1.bf16.msra.mxu0 %v621
  %777 = vmatprep.subr.bf16.mxu0 0
  %778 = vmatpush1.bf16.msra.mxu0 %v620
  %779 = vmatprep.subr.bf16.mxu0 0
  %780 = vmatpush1.bf16.msra.mxu0 %v619
  %781 = vmatprep.subr.bf16.mxu0 0
  %782 = vmatpush1.bf16.msra.mxu0 %v618
  %783 = vmatprep.subr.bf16.mxu0 0
  %784 = vmatpush1.bf16.msra.mxu0 %v617
  %785 = vmatprep.subr.bf16.mxu0 0
  %786 = vmatpush2.bf16.msra.mxu0 %v632
  %787 = vmatprep.subr.bf16.mxu0 0
  %788 = vmatpush2.bf16.msra.mxu0 %v631
  %789 = vmatprep.subr.bf16.mxu0 0
  %790 = vmatpush2.bf16.msra.mxu0 %v630
  %791 = vmatprep.subr.bf16.mxu0 0
  %792 = vmatpush2.bf16.msra.mxu0 %v629
  %793 = vmatprep.subr.bf16.mxu0 0
  %794 = vmatpush2.bf16.msra.mxu0 %v628
  %795 = vmatprep.subr.bf16.mxu0 0
  %796 = vmatpush2.bf16.msra.mxu0 %v627
  %797 = vmatprep.subr.bf16.mxu0 0
  %798 = vmatpush2.bf16.msra.mxu0 %v626
  %799 = vmatprep.subr.bf16.mxu0 0
  %800 = vmatpush2.bf16.msra.mxu0 %v625
  %801 = vmatprep.mubr.bf16.mxu0 %v335
  %802 = vmatmul.mubr.bf16.gmra.mxu0 %v333
  %v803 = vpop.f32.mrf.mxu0
  %v804 = vadd.f32 %v764, %v803
  %v805 = vpop.f32.mrf.mxu0
  %v806 = vpop.f32.mrf.mxu0
  %v807 = vpop.f32.mrf.mxu0
  %808 = vdwg.mxu0
  %809 = vmatprep.subr.bf16.mxu0 0
  %810 = vmatpush1.bf16.msra.mxu0 %v640
  %811 = vmatprep.subr.bf16.mxu0 0
  %812 = vmatpush1.bf16.msra.mxu0 %v639
  %813 = vmatprep.subr.bf16.mxu0 0
  %814 = vmatpush1.bf16.msra.mxu0 %v638
  %815 = vmatprep.subr.bf16.mxu0 0
  %816 = vmatpush1.bf16.msra.mxu0 %v637
  %817 = vmatprep.subr.bf16.mxu0 0
  %818 = vmatpush1.bf16.msra.mxu0 %v636
  %819 = vmatprep.subr.bf16.mxu0 0
  %820 = vmatpush1.bf16.msra.mxu0 %v635
  %821 = vmatprep.subr.bf16.mxu0 0
  %822 = vmatpush1.bf16.msra.mxu0 %v634
  %823 = vmatprep.subr.bf16.mxu0 0
  %824 = vmatpush1.bf16.msra.mxu0 %v633
  %825 = vmatprep.subr.bf16.mxu0 0
  %826 = vmatpush2.bf16.msra.mxu0 %v648
  %827 = vmatprep.subr.bf16.mxu0 0
  %828 = vmatpush2.bf16.msra.mxu0 %v647
  %829 = vmatprep.subr.bf16.mxu0 0
  %830 = vmatpush2.bf16.msra.mxu0 %v646
  %831 = vmatprep.subr.bf16.mxu0 0
  %832 = vmatpush2.bf16.msra.mxu0 %v645
  %833 = vmatprep.subr.bf16.mxu0 0
  %834 = vmatpush2.bf16.msra.mxu0 %v644
  %835 = vmatprep.subr.bf16.mxu0 0
  %836 = vmatpush2.bf16.msra.mxu0 %v643
  %837 = vmatprep.subr.bf16.mxu0 0
  %838 = vmatpush2.bf16.msra.mxu0 %v642
  %839 = vmatprep.subr.bf16.mxu0 0
  %840 = vmatpush2.bf16.msra.mxu0 %v641
  %841 = vmatprep.mubr.bf16.mxu0 %v332
  %842 = vmatmul.mubr.bf16.gmra.mxu0 %v318
  %v843 = vpop.f32.mrf.mxu0
  %v844 = vadd.f32 %v804, %v843
  %v845 = vpop.f32.mrf.mxu0
  %v846 = vpop.f32.mrf.mxu0
  %v847 = vpop.f32.mrf.mxu0
  %848 = vdwg.mxu0
  %849 = vmatprep.subr.bf16.mxu0 0
  %850 = vmatpush1.bf16.msra.mxu0 %v656
  %851 = vmatprep.subr.bf16.mxu0 0
  %852 = vmatpush1.bf16.msra.mxu0 %v655
  %853 = vmatprep.subr.bf16.mxu0 0
  %854 = vmatpush1.bf16.msra.mxu0 %v654
  %855 = vmatprep.subr.bf16.mxu0 0
  %856 = vmatpush1.bf16.msra.mxu0 %v653
  %857 = vmatprep.subr.bf16.mxu0 0
  %858 = vmatpush1.bf16.msra.mxu0 %v652
  %859 = vmatprep.subr.bf16.mxu0 0
  %860 = vmatpush1.bf16.msra.mxu0 %v651
  %861 = vmatprep.subr.bf16.mxu0 0
  %862 = vmatpush1.bf16.msra.mxu0 %v650
  %863 = vmatprep.subr.bf16.mxu0 0
  %864 = vmatpush1.bf16.msra.mxu0 %v649
  %865 = vmatprep.subr.bf16.mxu0 0
  %866 = vmatpush2.bf16.msra.mxu0 %v664
  %867 = vmatprep.subr.bf16.mxu0 0
  %868 = vmatpush2.bf16.msra.mxu0 %v663
  %869 = vmatprep.subr.bf16.mxu0 0
  %870 = vmatpush2.bf16.msra.mxu0 %v662
  %871 = vmatprep.subr.bf16.mxu0 0
  %872 = vmatpush2.bf16.msra.mxu0 %v661
  %873 = vmatprep.subr.bf16.mxu0 0
  %874 = vmatpush2.bf16.msra.mxu0 %v660
  %875 = vmatprep.subr.bf16.mxu0 0
  %876 = vmatpush2.bf16.msra.mxu0 %v659
  %877 = vmatprep.subr.bf16.mxu0 0
  %878 = vmatpush2.bf16.msra.mxu0 %v658
  %879 = vmatprep.subr.bf16.mxu0 0
  %880 = vmatpush2.bf16.msra.mxu0 %v657
  %881 = vmatprep.mubr.bf16.mxu0 %v336
  %882 = vmatmul.mubr.bf16.gmra.mxu0 %v334
  %v883 = vpop.f32.mrf.mxu0
  %v884 = vadd.f32 %v844, %v883
  %v885 = vpop.f32.mrf.mxu0
  %v886 = vpop.f32.mrf.mxu0
  %v887 = vpop.f32.mrf.mxu0
  %888 = vdwg.mxu0
  %890 = vrot.lane.b32.xlu0 %v884, 64
  %v891 = vpop.permute.xlu0 %890
  %vm893 = vcmask 523264
  %v894 = vsel %vm893, 0.0, %v891
  %v896 = vcombine.high %v29, %v29
  %v898 = vunpack.c.l.s4 1966171168
  %v899 = vunpack.c.0.s8 %v898
  %v900 = vlaneseq
  %v901 = vshrl.u32 %v900, 7
  %v902 = vsub.s32 %v899, %v901
  %v903 = vrot.slane %v29, %v902
  %v905 = vunpack.c.l.s4 1966171168
  %v906 = vunpack.c.0.s8 %v905
  %v907 = vlaneseq
  %v908 = vshrl.u32 %v907, 7
  %v909 = vsub.s32 %v906, %v908
  %v910 = vrot.slane %v896, %v909
  %v911 = vcombine.high %v903, %v903
  %v912 = vcombine.high %v910, %v910
  %v914 = vunpack.c.l.s4 1966171168
  %v915 = vunpack.c.0.s8 %v914
  %v916 = vlaneseq
  %v917 = vshrl.u32 %v916, 7
  %v918 = vsub.s32 %v915, %v917
  %v919 = vrot.slane %v903, %v918
  %v921 = vunpack.c.l.s4 1966171168
  %v922 = vunpack.c.0.s8 %v921
  %v923 = vlaneseq
  %v924 = vshrl.u32 %v923, 7
  %v925 = vsub.s32 %v922, %v924
  %v926 = vrot.slane %v910, %v925
  %v928 = vunpack.c.l.s4 1966171168
  %v929 = vunpack.c.0.s8 %v928
  %v930 = vlaneseq
  %v931 = vshrl.u32 %v930, 7
  %v932 = vsub.s32 %v929, %v931
  %v933 = vrot.slane %v911, %v932
  %v935 = vunpack.c.l.s4 1966171168
  %v936 = vunpack.c.0.s8 %v935
  %v937 = vlaneseq
  %v938 = vshrl.u32 %v937, 7
  %v939 = vsub.s32 %v936, %v938
  %v940 = vrot.slane %v912, %v939
  %v941 = vcombine.high %v919, %v919
  %v942 = vcombine.high %v926, %v926
  %v943 = vcombine.high %v933, %v933
  %v944 = vcombine.high %v940, %v940
  %v1081 = vunpack.c.l.b16 %v31
  %v1082 = vunpack.c.l.b16 %v32
  %v1083 = vunpack.c.l.b16 %v33
  %v1084 = vunpack.c.l.b16 %v34
  %v1085 = vunpack.c.l.b16 %v35
  %v1086 = vunpack.c.l.b16 %v36
  %v1087 = vunpack.c.l.b16 %v37
  %v1088 = vunpack.c.l.b16 %v38
  %v1089 = vunpack.c.l.b16 %v39
  %v1090 = vunpack.c.l.b16 %v40
  %v1091 = vunpack.c.l.b16 %v41
  %v1092 = vunpack.c.l.b16 %v42
  %v1093 = vunpack.c.l.b16 %v43
  %v1094 = vunpack.c.l.b16 %v44
  %v1095 = vunpack.c.l.b16 %v45
  %v1096 = vunpack.c.l.b16 %v46
  %v1097 = vunpack.c.l.b16 %v47
  %v1098 = vunpack.c.l.b16 %v48
  %v1099 = vunpack.c.l.b16 %v49
  %v1100 = vunpack.c.l.b16 %v50
  %v1101 = vunpack.c.l.b16 %v51
  %v1102 = vunpack.c.l.b16 %v52
  %v1103 = vunpack.c.l.b16 %v53
  %v1104 = vunpack.c.l.b16 %v54
  %v1105 = vunpack.c.l.b16 %v55
  %v1106 = vunpack.c.l.b16 %v56
  %v1107 = vunpack.c.l.b16 %v57
  %v1108 = vunpack.c.l.b16 %v58
  %v1109 = vunpack.c.l.b16 %v59
  %v1110 = vunpack.c.l.b16 %v60
  %v1111 = vunpack.c.l.b16 %v61
  %v1112 = vunpack.c.l.b16 %v62
  %v1113 = vunpack.c.l.b16 %v63
  %v1114 = vunpack.c.l.b16 %v64
  %v1115 = vunpack.c.l.b16 %v65
  %v1116 = vunpack.c.l.b16 %v66
  %v1117 = vunpack.c.l.b16 %v67
  %v1118 = vunpack.c.l.b16 %v68
  %v1119 = vunpack.c.l.b16 %v69
  %v1120 = vunpack.c.l.b16 %v70
  %v1121 = vunpack.c.l.b16 %v71
  %v1122 = vunpack.c.l.b16 %v72
  %v1123 = vunpack.c.l.b16 %v73
  %v1124 = vunpack.c.l.b16 %v74
  %v1125 = vunpack.c.l.b16 %v75
  %v1126 = vunpack.c.l.b16 %v76
  %v1127 = vunpack.c.l.b16 %v77
  %v1128 = vunpack.c.l.b16 %v78
  %v1129 = vunpack.c.l.b16 %v79
  %v1130 = vunpack.c.l.b16 %v80
  %v1131 = vunpack.c.l.b16 %v81
  %v1132 = vunpack.c.l.b16 %v82
  %v1133 = vunpack.c.l.b16 %v83
  %v1134 = vunpack.c.l.b16 %v84
  %v1135 = vunpack.c.l.b16 %v85
  %v1136 = vunpack.c.l.b16 %v86
  %v1137 = vunpack.c.l.b16 %v87
  %v1138 = vunpack.c.l.b16 %v88
  %v1139 = vunpack.c.l.b16 %v89
  %v1140 = vunpack.c.l.b16 %v90
  %v1141 = vunpack.c.l.b16 %v91
  %v1142 = vunpack.c.l.b16 %v92
  %v1143 = vunpack.c.l.b16 %v93
  %v1144 = vunpack.c.l.b16 %v94
  %v1145 = vunpack.c.l.b16 %v95
  %v1146 = vunpack.c.l.b16 %v96
  %v1147 = vunpack.c.l.b16 %v97
  %v1148 = vunpack.c.l.b16 %v98
  %v1149 = vunpack.c.l.b16 %v99
  %v1150 = vunpack.c.l.b16 %v100
  %v1151 = vunpack.c.l.b16 %v101
  %v1152 = vunpack.c.l.b16 %v102
  %v1153 = vunpack.c.l.b16 %v103
  %v1154 = vunpack.c.l.b16 %v104
  %v1155 = vunpack.c.l.b16 %v105
  %v1156 = vunpack.c.l.b16 %v106
  %v1157 = vunpack.c.l.b16 %v107
  %v1158 = vunpack.c.l.b16 %v108
  %v1159 = vunpack.c.l.b16 %v109
  %v1160 = vunpack.c.l.b16 %v110
  %v1161 = vunpack.c.l.b16 %v111
  %v1162 = vunpack.c.l.b16 %v112
  %v1163 = vunpack.c.l.b16 %v113
  %v1164 = vunpack.c.l.b16 %v114
  %v1165 = vunpack.c.l.b16 %v115
  %v1166 = vunpack.c.l.b16 %v116
  %v1167 = vunpack.c.l.b16 %v117
  %v1168 = vunpack.c.l.b16 %v118
  %v1169 = vunpack.c.l.b16 %v119
  %v1170 = vunpack.c.l.b16 %v120
  %v1171 = vunpack.c.l.b16 %v121
  %v1172 = vunpack.c.l.b16 %v122
  %v1173 = vunpack.c.l.b16 %v123
  %v1174 = vunpack.c.l.b16 %v124
  %v1175 = vunpack.c.l.b16 %v125
  %v1176 = vunpack.c.l.b16 %v126
  %v1177 = vunpack.c.l.b16 %v127
  %v1178 = vunpack.c.l.b16 %v128
  %v1179 = vunpack.c.l.b16 %v129
  %v1180 = vunpack.c.l.b16 %v130
  %v1181 = vunpack.c.l.b16 %v131
  %v1182 = vunpack.c.l.b16 %v132
  %v1183 = vunpack.c.l.b16 %v133
  %v1184 = vunpack.c.l.b16 %v134
  %v1185 = vunpack.c.l.b16 %v135
  %v1186 = vunpack.c.l.b16 %v136
  %v1187 = vunpack.c.l.b16 %v137
  %v1188 = vunpack.c.l.b16 %v138
  %v1189 = vunpack.c.l.b16 %v139
  %v1190 = vunpack.c.l.b16 %v140
  %v1191 = vunpack.c.l.b16 %v141
  %v1192 = vunpack.c.l.b16 %v142
  %v1193 = vunpack.c.l.b16 %v143
  %v1194 = vunpack.c.l.b16 %v144
  %v1195 = vunpack.c.l.b16 %v145
  %v1196 = vunpack.c.l.b16 %v146
  %v1197 = vunpack.c.l.b16 %v147
  %v1198 = vunpack.c.l.b16 %v148
  %v1199 = vunpack.c.l.b16 %v149
  %v1200 = vunpack.c.l.b16 %v150
  %v1201 = vunpack.c.l.b16 %v151
  %v1202 = vunpack.c.l.b16 %v152
  %v1203 = vunpack.c.l.b16 %v153
  %v1204 = vunpack.c.l.b16 %v154
  %v1205 = vunpack.c.l.b16 %v155
  %v1206 = vunpack.c.l.b16 %v156
  %v1207 = vunpack.c.l.b16 %v157
  %v1208 = vunpack.c.l.b16 %v158
  %v1209 = vpack.c.b16 %v1082, %v1081
  %v1210 = vpack.c.b16 %v1084, %v1083
  %v1211 = vpack.c.b16 %v1086, %v1085
  %v1212 = vpack.c.b16 %v1088, %v1087
  %v1213 = vpack.c.b16 %v1090, %v1089
  %v1214 = vpack.c.b16 %v1092, %v1091
  %v1215 = vpack.c.b16 %v1094, %v1093
  %v1216 = vpack.c.b16 %v1096, %v1095
  %v1217 = vpack.c.b16 %v1098, %v1097
  %v1218 = vpack.c.b16 %v1100, %v1099
  %v1219 = vpack.c.b16 %v1102, %v1101
  %v1220 = vpack.c.b16 %v1104, %v1103
  %v1221 = vpack.c.b16 %v1106, %v1105
  %v1222 = vpack.c.b16 %v1108, %v1107
  %v1223 = vpack.c.b16 %v1110, %v1109
  %v1224 = vpack.c.b16 %v1112, %v1111
  %v1225 = vpack.c.b16 %v1114, %v1113
  %v1226 = vpack.c.b16 %v1116, %v1115
  %v1227 = vpack.c.b16 %v1118, %v1117
  %v1228 = vpack.c.b16 %v1120, %v1119
  %v1229 = vpack.c.b16 %v1122, %v1121
  %v1230 = vpack.c.b16 %v1124, %v1123
  %v1231 = vpack.c.b16 %v1126, %v1125
  %v1232 = vpack.c.b16 %v1128, %v1127
  %v1233 = vpack.c.b16 %v1130, %v1129
  %v1234 = vpack.c.b16 %v1132, %v1131
  %v1235 = vpack.c.b16 %v1134, %v1133
  %v1236 = vpack.c.b16 %v1136, %v1135
  %v1237 = vpack.c.b16 %v1138, %v1137
  %v1238 = vpack.c.b16 %v1140, %v1139
  %v1239 = vpack.c.b16 %v1142, %v1141
  %v1240 = vpack.c.b16 %v1144, %v1143
  %v1241 = vpack.c.b16 %v1146, %v1145
  %v1242 = vpack.c.b16 %v1148, %v1147
  %v1243 = vpack.c.b16 %v1150, %v1149
  %v1244 = vpack.c.b16 %v1152, %v1151
  %v1245 = vpack.c.b16 %v1154, %v1153
  %v1246 = vpack.c.b16 %v1156, %v1155
  %v1247 = vpack.c.b16 %v1158, %v1157
  %v1248 = vpack.c.b16 %v1160, %v1159
  %v1249 = vpack.c.b16 %v1162, %v1161
  %v1250 = vpack.c.b16 %v1164, %v1163
  %v1251 = vpack.c.b16 %v1166, %v1165
  %v1252 = vpack.c.b16 %v1168, %v1167
  %v1253 = vpack.c.b16 %v1170, %v1169
  %v1254 = vpack.c.b16 %v1172, %v1171
  %v1255 = vpack.c.b16 %v1174, %v1173
  %v1256 = vpack.c.b16 %v1176, %v1175
  %v1257 = vpack.c.b16 %v1178, %v1177
  %v1258 = vpack.c.b16 %v1180, %v1179
  %v1259 = vpack.c.b16 %v1182, %v1181
  %v1260 = vpack.c.b16 %v1184, %v1183
  %v1261 = vpack.c.b16 %v1186, %v1185
  %v1262 = vpack.c.b16 %v1188, %v1187
  %v1263 = vpack.c.b16 %v1190, %v1189
  %v1264 = vpack.c.b16 %v1192, %v1191
  %v1265 = vpack.c.b16 %v1194, %v1193
  %v1266 = vpack.c.b16 %v1196, %v1195
  %v1267 = vpack.c.b16 %v1198, %v1197
  %v1268 = vpack.c.b16 %v1200, %v1199
  %v1269 = vpack.c.b16 %v1202, %v1201
  %v1270 = vpack.c.b16 %v1204, %v1203
  %v1271 = vpack.c.b16 %v1206, %v1205
  %v1272 = vpack.c.b16 %v1208, %v1207
  %1337 = vmatprep.subr.bf16.mxu0 0
  %1338 = vmatpush1.bf16.msra.mxu0 %v1216
  %1339 = vmatprep.subr.bf16.mxu0 0
  %1340 = vmatpush1.bf16.msra.mxu0 %v1215
  %1341 = vmatprep.subr.bf16.mxu0 0
  %1342 = vmatpush1.bf16.msra.mxu0 %v1214
  %1343 = vmatprep.subr.bf16.mxu0 0
  %1344 = vmatpush1.bf16.msra.mxu0 %v1213
  %1345 = vmatprep.subr.bf16.mxu0 0
  %1346 = vmatpush1.bf16.msra.mxu0 %v1212
  %1347 = vmatprep.subr.bf16.mxu0 0
  %1348 = vmatpush1.bf16.msra.mxu0 %v1211
  %1349 = vmatprep.subr.bf16.mxu0 0
  %1350 = vmatpush1.bf16.msra.mxu0 %v1210
  %1351 = vmatprep.subr.bf16.mxu0 0
  %1352 = vmatpush1.bf16.msra.mxu0 %v1209
  %1353 = vmatprep.subr.bf16.mxu0 0
  %1354 = vmatpush2.bf16.msra.mxu0 %v1224
  %1355 = vmatprep.subr.bf16.mxu0 0
  %1356 = vmatpush2.bf16.msra.mxu0 %v1223
  %1357 = vmatprep.subr.bf16.mxu0 0
  %1358 = vmatpush2.bf16.msra.mxu0 %v1222
  %1359 = vmatprep.subr.bf16.mxu0 0
  %1360 = vmatpush2.bf16.msra.mxu0 %v1221
  %1361 = vmatprep.subr.bf16.mxu0 0
  %1362 = vmatpush2.bf16.msra.mxu0 %v1220
  %1363 = vmatprep.subr.bf16.mxu0 0
  %1364 = vmatpush2.bf16.msra.mxu0 %v1219
  %1365 = vmatprep.subr.bf16.mxu0 0
  %1366 = vmatpush2.bf16.msra.mxu0 %v1218
  %1367 = vmatprep.subr.bf16.mxu0 0
  %1368 = vmatpush2.bf16.msra.mxu0 %v1217
  %1369 = vmatprep.mubr.bf16.mxu0 %v933
  %1370 = vmatmul.mubr.bf16.gmra.mxu0 %v919
  %v1371 = vpop.f32.mrf.mxu0
  %v1372 = vadd.f32 %v894, %v1371
  %v1373 = vpop.f32.mrf.mxu0
  %v1374 = vpop.f32.mrf.mxu0
  %v1375 = vpop.f32.mrf.mxu0
  %1376 = vdwg.mxu0
  %1377 = vmatprep.subr.bf16.mxu0 0
  %1378 = vmatpush1.bf16.msra.mxu0 %v1232
  %1379 = vmatprep.subr.bf16.mxu0 0
  %1380 = vmatpush1.bf16.msra.mxu0 %v1231
  %1381 = vmatprep.subr.bf16.mxu0 0
  %1382 = vmatpush1.bf16.msra.mxu0 %v1230
  %1383 = vmatprep.subr.bf16.mxu0 0
  %1384 = vmatpush1.bf16.msra.mxu0 %v1229
  %1385 = vmatprep.subr.bf16.mxu0 0
  %1386 = vmatpush1.bf16.msra.mxu0 %v1228
  %1387 = vmatprep.subr.bf16.mxu0 0
  %1388 = vmatpush1.bf16.msra.mxu0 %v1227
  %1389 = vmatprep.subr.bf16.mxu0 0
  %1390 = vmatpush1.bf16.msra.mxu0 %v1226
  %1391 = vmatprep.subr.bf16.mxu0 0
  %1392 = vmatpush1.bf16.msra.mxu0 %v1225
  %1393 = vmatprep.subr.bf16.mxu0 0
  %1394 = vmatpush2.bf16.msra.mxu0 %v1240
  %1395 = vmatprep.subr.bf16.mxu0 0
  %1396 = vmatpush2.bf16.msra.mxu0 %v1239
  %1397 = vmatprep.subr.bf16.mxu0 0
  %1398 = vmatpush2.bf16.msra.mxu0 %v1238
  %1399 = vmatprep.subr.bf16.mxu0 0
  %1400 = vmatpush2.bf16.msra.mxu0 %v1237
  %1401 = vmatprep.subr.bf16.mxu0 0
  %1402 = vmatpush2.bf16.msra.mxu0 %v1236
  %1403 = vmatprep.subr.bf16.mxu0 0
  %1404 = vmatpush2.bf16.msra.mxu0 %v1235
  %1405 = vmatprep.subr.bf16.mxu0 0
  %1406 = vmatpush2.bf16.msra.mxu0 %v1234
  %1407 = vmatprep.subr.bf16.mxu0 0
  %1408 = vmatpush2.bf16.msra.mxu0 %v1233
  %1409 = vmatprep.mubr.bf16.mxu0 %v943
  %1410 = vmatmul.mubr.bf16.gmra.mxu0 %v941
  %v1411 = vpop.f32.mrf.mxu0
  %v1412 = vadd.f32 %v1372, %v1411
  %v1413 = vpop.f32.mrf.mxu0
  %v1414 = vpop.f32.mrf.mxu0
  %v1415 = vpop.f32.mrf.mxu0
  %1416 = vdwg.mxu0
  %1417 = vmatprep.subr.bf16.mxu0 0
  %1418 = vmatpush1.bf16.msra.mxu0 %v1248
  %1419 = vmatprep.subr.bf16.mxu0 0
  %1420 = vmatpush1.bf16.msra.mxu0 %v1247
  %1421 = vmatprep.subr.bf16.mxu0 0
  %1422 = vmatpush1.bf16.msra.mxu0 %v1246
  %1423 = vmatprep.subr.bf16.mxu0 0
  %1424 = vmatpush1.bf16.msra.mxu0 %v1245
  %1425 = vmatprep.subr.bf16.mxu0 0
  %1426 = vmatpush1.bf16.msra.mxu0 %v1244
  %1427 = vmatprep.subr.bf16.mxu0 0
  %1428 = vmatpush1.bf16.msra.mxu0 %v1243
  %1429 = vmatprep.subr.bf16.mxu0 0
  %1430 = vmatpush1.bf16.msra.mxu0 %v1242
  %1431 = vmatprep.subr.bf16.mxu0 0
  %1432 = vmatpush1.bf16.msra.mxu0 %v1241
  %1433 = vmatprep.subr.bf16.mxu0 0
  %1434 = vmatpush2.bf16.msra.mxu0 %v1256
  %1435 = vmatprep.subr.bf16.mxu0 0
  %1436 = vmatpush2.bf16.msra.mxu0 %v1255
  %1437 = vmatprep.subr.bf16.mxu0 0
  %1438 = vmatpush2.bf16.msra.mxu0 %v1254
  %1439 = vmatprep.subr.bf16.mxu0 0
  %1440 = vmatpush2.bf16.msra.mxu0 %v1253
  %1441 = vmatprep.subr.bf16.mxu0 0
  %1442 = vmatpush2.bf16.msra.mxu0 %v1252
  %1443 = vmatprep.subr.bf16.mxu0 0
  %1444 = vmatpush2.bf16.msra.mxu0 %v1251
  %1445 = vmatprep.subr.bf16.mxu0 0
  %1446 = vmatpush2.bf16.msra.mxu0 %v1250
  %1447 = vmatprep.subr.bf16.mxu0 0
  %1448 = vmatpush2.bf16.msra.mxu0 %v1249
  %1449 = vmatprep.mubr.bf16.mxu0 %v940
  %1450 = vmatmul.mubr.bf16.gmra.mxu0 %v926
  %v1451 = vpop.f32.mrf.mxu0
  %v1452 = vadd.f32 %v1412, %v1451
  %v1453 = vpop.f32.mrf.mxu0
  %v1454 = vpop.f32.mrf.mxu0
  %v1455 = vpop.f32.mrf.mxu0
  %1456 = vdwg.mxu0
  %1457 = vmatprep.subr.bf16.mxu0 0
  %1458 = vmatpush1.bf16.msra.mxu0 %v1264
  %1459 = vmatprep.subr.bf16.mxu0 0
  %1460 = vmatpush1.bf16.msra.mxu0 %v1263
  %1461 = vmatprep.subr.bf16.mxu0 0
  %1462 = vmatpush1.bf16.msra.mxu0 %v1262
  %1463 = vmatprep.subr.bf16.mxu0 0
  %1464 = vmatpush1.bf16.msra.mxu0 %v1261
  %1465 = vmatprep.subr.bf16.mxu0 0
  %1466 = vmatpush1.bf16.msra.mxu0 %v1260
  %1467 = vmatprep.subr.bf16.mxu0 0
  %1468 = vmatpush1.bf16.msra.mxu0 %v1259
  %1469 = vmatprep.subr.bf16.mxu0 0
  %1470 = vmatpush1.bf16.msra.mxu0 %v1258
  %1471 = vmatprep.subr.bf16.mxu0 0
  %1472 = vmatpush1.bf16.msra.mxu0 %v1257
  %1473 = vmatprep.subr.bf16.mxu0 0
  %1474 = vmatpush2.bf16.msra.mxu0 %v1272
  %1475 = vmatprep.subr.bf16.mxu0 0
  %1476 = vmatpush2.bf16.msra.mxu0 %v1271
  %1477 = vmatprep.subr.bf16.mxu0 0
  %1478 = vmatpush2.bf16.msra.mxu0 %v1270
  %1479 = vmatprep.subr.bf16.mxu0 0
  %1480 = vmatpush2.bf16.msra.mxu0 %v1269
  %1481 = vmatprep.subr.bf16.mxu0 0
  %1482 = vmatpush2.bf16.msra.mxu0 %v1268
  %1483 = vmatprep.subr.bf16.mxu0 0
  %1484 = vmatpush2.bf16.msra.mxu0 %v1267
  %1485 = vmatprep.subr.bf16.mxu0 0
  %1486 = vmatpush2.bf16.msra.mxu0 %v1266
  %1487 = vmatprep.subr.bf16.mxu0 0
  %1488 = vmatpush2.bf16.msra.mxu0 %v1265
  %1489 = vmatprep.mubr.bf16.mxu0 %v944
  %1490 = vmatmul.mubr.bf16.gmra.mxu0 %v942
  %v1491 = vpop.f32.mrf.mxu0
  %v1492 = vadd.f32 %v1452, %v1491
  %v1493 = vpop.f32.mrf.mxu0
  %v1494 = vpop.f32.mrf.mxu0
  %v1495 = vpop.f32.mrf.mxu0
  %1496 = vdwg.mxu0
  %v1497 = vld [vmem:[%s4] sm:$0x1]
  %v1499 = vlaneseq
  %v1500 = vshrl.u32 %v1499, 7
  %v1501 = vsub.s32 0, %v1500
  %v1502 = vrot.slane %v1497, %v1501
  %v1504 = vadd.f32 %v1492, %v1502
  %1505 = vst [vmem:[%s7] sm:$0x3] %v1504
  %v1506 = vpack.c.bf16 %v1504, %v1504
  %v1507 = vld [vmem:[%s5] sm:$0xff]
  %v1508 = vld [vmem:[%s5 + $0x8] sm:$0xff]
  %v1509 = vld [vmem:[%s5 + $0x10] sm:$0xff]
  %v1510 = vld [vmem:[%s5 + $0x18] sm:$0xff]
  %v1511 = vld [vmem:[%s5 + $0x20] sm:$0xff]
  %v1512 = vld [vmem:[%s5 + $0x28] sm:$0xff]
  %v1513 = vld [vmem:[%s5 + $0x30] sm:$0xff]
  %v1514 = vld [vmem:[%s5 + $0x38] sm:$0xff]
  %v1515 = vld [vmem:[%s5 + $0x40] sm:$0xff]
  %v1516 = vld [vmem:[%s5 + $0x48] sm:$0xff]
  %v1517 = vld [vmem:[%s5 + $0x50] sm:$0xff]
  %v1518 = vld [vmem:[%s5 + $0x58] sm:$0xff]
  %v1519 = vld [vmem:[%s5 + $0x60] sm:$0xff]
  %v1520 = vld [vmem:[%s5 + $0x68] sm:$0xff]
  %v1521 = vld [vmem:[%s5 + $0x70] sm:$0xff]
  %v1522 = vld [vmem:[%s5 + $0x78] sm:$0xff]
  %v1523 = vld [vmem:[%s5 + $0x80] sm:$0xff]
  %v1524 = vld [vmem:[%s5 + $0x88] sm:$0xff]
  %v1525 = vld [vmem:[%s5 + $0x90] sm:$0xff]
  %v1526 = vld [vmem:[%s5 + $0x98] sm:$0xff]
  %v1527 = vld [vmem:[%s5 + $0xa0] sm:$0xff]
  %v1528 = vld [vmem:[%s5 + $0xa8] sm:$0xff]
  %v1529 = vld [vmem:[%s5 + $0xb0] sm:$0xff]
  %v1530 = vld [vmem:[%s5 + $0xb8] sm:$0xff]
  %v1531 = vld [vmem:[%s5 + $0xc0] sm:$0xff]
  %v1532 = vld [vmem:[%s5 + $0xc8] sm:$0xff]
  %v1533 = vld [vmem:[%s5 + $0xd0] sm:$0xff]
  %v1534 = vld [vmem:[%s5 + $0xd8] sm:$0xff]
  %v1535 = vld [vmem:[%s5 + $0xe0] sm:$0xff]
  %v1536 = vld [vmem:[%s5 + $0xe8] sm:$0xff]
  %v1537 = vld [vmem:[%s5 + $0xf0] sm:$0xff]
  %v1538 = vld [vmem:[%s5 + $0xf8] sm:$0xff]
  %v1539 = vld [vmem:[%s6] sm:$0xff]
  %v1541 = vlaneseq
  %v1542 = vshrl.u32 %v1541, 7
  %v1543 = vsub.s32 0, %v1542
  %v1544 = vrot.slane %v1539, %v1543
  %v1545 = vlaneseq
  %v1546 = vshrl.u32 %v1545, 7
  %v1547 = vsub.s32 1, %v1546
  %v1548 = vrot.slane %v1539, %v1547
  %v1549 = vlaneseq
  %v1550 = vshrl.u32 %v1549, 7
  %v1551 = vsub.s32 2, %v1550
  %v1552 = vrot.slane %v1539, %v1551
  %v1553 = vlaneseq
  %v1554 = vshrl.u32 %v1553, 7
  %v1555 = vsub.s32 3, %v1554
  %v1556 = vrot.slane %v1539, %v1555
  %v1557 = vlaneseq
  %v1558 = vshrl.u32 %v1557, 7
  %v1559 = vsub.s32 4, %v1558
  %v1560 = vrot.slane %v1539, %v1559
  %v1561 = vlaneseq
  %v1562 = vshrl.u32 %v1561, 7
  %v1563 = vsub.s32 5, %v1562
  %v1564 = vrot.slane %v1539, %v1563
  %v1565 = vlaneseq
  %v1566 = vshrl.u32 %v1565, 7
  %v1567 = vsub.s32 6, %v1566
  %v1568 = vrot.slane %v1539, %v1567
  %v1569 = vlaneseq
  %v1570 = vshrl.u32 %v1569, 7
  %v1571 = vsub.s32 7, %v1570
  %v1572 = vrot.slane %v1539, %v1571
  %1582 = vrot.lane.b32.xlu0 %v1506, 96
  %v1583 = vpop.permute.xlu0 %1582
  %v1616 = vunpack.c.l.b16 %v1507
  %v1617 = vunpack.c.h.b16 %v1507
  %v1618 = vunpack.c.l.b16 %v1508
  %v1619 = vunpack.c.h.b16 %v1508
  %v1620 = vunpack.c.l.b16 %v1509
  %v1621 = vunpack.c.h.b16 %v1509
  %v1622 = vunpack.c.l.b16 %v1510
  %v1623 = vunpack.c.h.b16 %v1510
  %v1624 = vunpack.c.l.b16 %v1511
  %v1625 = vunpack.c.h.b16 %v1511
  %v1626 = vunpack.c.l.b16 %v1512
  %v1627 = vunpack.c.h.b16 %v1512
  %v1628 = vunpack.c.l.b16 %v1513
  %v1629 = vunpack.c.h.b16 %v1513
  %v1630 = vunpack.c.l.b16 %v1514
  %v1631 = vunpack.c.h.b16 %v1514
  %v1632 = vunpack.c.l.b16 %v1515
  %v1633 = vunpack.c.h.b16 %v1515
  %v1634 = vunpack.c.l.b16 %v1516
  %v1635 = vunpack.c.h.b16 %v1516
  %v1636 = vunpack.c.l.b16 %v1517
  %v1637 = vunpack.c.h.b16 %v1517
  %v1638 = vunpack.c.l.b16 %v1518
  %v1639 = vunpack.c.h.b16 %v1518
  %v1640 = vunpack.c.l.b16 %v1519
  %v1641 = vunpack.c.h.b16 %v1519
  %v1642 = vunpack.c.l.b16 %v1520
  %v1643 = vunpack.c.h.b16 %v1520
  %v1644 = vunpack.c.l.b16 %v1521
  %v1645 = vunpack.c.h.b16 %v1521
  %v1646 = vunpack.c.l.b16 %v1522
  %v1647 = vunpack.c.h.b16 %v1522
  %v1648 = vunpack.c.l.b16 %v1523
  %v1649 = vunpack.c.h.b16 %v1523
  %v1650 = vunpack.c.l.b16 %v1524
  %v1651 = vunpack.c.h.b16 %v1524
  %v1652 = vunpack.c.l.b16 %v1525
  %v1653 = vunpack.c.h.b16 %v1525
  %v1654 = vunpack.c.l.b16 %v1526
  %v1655 = vunpack.c.h.b16 %v1526
  %v1656 = vunpack.c.l.b16 %v1527
  %v1657 = vunpack.c.h.b16 %v1527
  %v1658 = vunpack.c.l.b16 %v1528
  %v1659 = vunpack.c.h.b16 %v1528
  %v1660 = vunpack.c.l.b16 %v1529
  %v1661 = vunpack.c.h.b16 %v1529
  %v1662 = vunpack.c.l.b16 %v1530
  %v1663 = vunpack.c.h.b16 %v1530
  %v1664 = vunpack.c.l.b16 %v1531
  %v1665 = vunpack.c.h.b16 %v1531
  %v1666 = vunpack.c.l.b16 %v1532
  %v1667 = vunpack.c.h.b16 %v1532
  %v1668 = vunpack.c.l.b16 %v1533
  %v1669 = vunpack.c.h.b16 %v1533
  %v1670 = vunpack.c.l.b16 %v1534
  %v1671 = vunpack.c.h.b16 %v1534
  %v1672 = vunpack.c.l.b16 %v1535
  %v1673 = vunpack.c.h.b16 %v1535
  %v1674 = vunpack.c.l.b16 %v1536
  %v1675 = vunpack.c.h.b16 %v1536
  %v1676 = vunpack.c.l.b16 %v1537
  %v1677 = vunpack.c.h.b16 %v1537
  %v1678 = vunpack.c.l.b16 %v1538
  %v1679 = vunpack.c.h.b16 %v1538
  %v1680 = vpack.c.b16 %v1624, %v1616
  %v1681 = vpack.c.b16 %v1625, %v1617
  %v1682 = vpack.c.b16 %v1626, %v1618
  %v1683 = vpack.c.b16 %v1627, %v1619
  %v1684 = vpack.c.b16 %v1628, %v1620
  %v1685 = vpack.c.b16 %v1629, %v1621
  %v1686 = vpack.c.b16 %v1630, %v1622
  %v1687 = vpack.c.b16 %v1631, %v1623
  %v1688 = vpack.c.b16 %v1640, %v1632
  %v1689 = vpack.c.b16 %v1641, %v1633
  %v1690 = vpack.c.b16 %v1642, %v1634
  %v1691 = vpack.c.b16 %v1643, %v1635
  %v1692 = vpack.c.b16 %v1644, %v1636
  %v1693 = vpack.c.b16 %v1645, %v1637
  %v1694 = vpack.c.b16 %v1646, %v1638
  %v1695 = vpack.c.b16 %v1647, %v1639
  %v1696 = vpack.c.b16 %v1656, %v1648
  %v1697 = vpack.c.b16 %v1657, %v1649
  %v1698 = vpack.c.b16 %v1658, %v1650
  %v1699 = vpack.c.b16 %v1659, %v1651
  %v1700 = vpack.c.b16 %v1660, %v1652
  %v1701 = vpack.c.b16 %v1661, %v1653
  %v1702 = vpack.c.b16 %v1662, %v1654
  %v1703 = vpack.c.b16 %v1663, %v1655
  %v1704 = vpack.c.b16 %v1672, %v1664
  %v1705 = vpack.c.b16 %v1673, %v1665
  %v1706 = vpack.c.b16 %v1674, %v1666
  %v1707 = vpack.c.b16 %v1675, %v1667
  %v1708 = vpack.c.b16 %v1676, %v1668
  %v1709 = vpack.c.b16 %v1677, %v1669
  %v1710 = vpack.c.b16 %v1678, %v1670
  %v1711 = vpack.c.b16 %v1679, %v1671
  %v1745 = vsel %vm893, %v1583, 0
  %1747 = vmatprep.subr.bf16.mxu0 0
  %1748 = vmatpush1.bf16.msra.mxu0 0
  %1749 = vmatprep.subr.bf16.mxu0 0
  %1750 = vmatpush1.bf16.msra.mxu0 0
  %1751 = vmatprep.subr.bf16.mxu0 0
  %1752 = vmatpush1.bf16.msra.mxu0 0
  %1753 = vmatprep.subr.bf16.mxu0 0
  %1754 = vmatpush1.bf16.msra.mxu0 0
  %1755 = vmatprep.subr.bf16.mxu0 %v1705
  %1756 = vmatpush1.bf16.msra.mxu0 %v1704
  %1757 = vmatprep.subr.bf16.mxu0 %v1697
  %1758 = vmatpush1.bf16.msra.mxu0 %v1696
  %1759 = vmatprep.subr.bf16.mxu0 %v1689
  %1760 = vmatpush1.bf16.msra.mxu0 %v1688
  %1761 = vmatprep.subr.bf16.mxu0 %v1681
  %1762 = vmatpush1.bf16.msra.mxu0 %v1680
  %1763 = vmatprep.subr.bf16.mxu0 0
  %1764 = vmatpush2.bf16.msra.mxu0 0
  %1765 = vmatprep.subr.bf16.mxu0 0
  %1766 = vmatpush2.bf16.msra.mxu0 0
  %1767 = vmatprep.subr.bf16.mxu0 0
  %1768 = vmatpush2.bf16.msra.mxu0 0
  %1769 = vmatprep.subr.bf16.mxu0 0
  %1770 = vmatpush2.bf16.msra.mxu0 0
  %1771 = vmatprep.subr.bf16.mxu0 0
  %1772 = vmatpush2.bf16.msra.mxu0 0
  %1773 = vmatprep.subr.bf16.mxu0 0
  %1774 = vmatpush2.bf16.msra.mxu0 0
  %1775 = vmatprep.subr.bf16.mxu0 0
  %1776 = vmatpush2.bf16.msra.mxu0 0
  %1777 = vmatprep.subr.bf16.mxu0 0
  %1778 = vmatpush2.bf16.msra.mxu0 0
  %1779 = vmatprep.mubr.bf16.mxu0 0
  %1780 = vmatmul.mubr.bf16.gmra.mxu0 %v1745
  %v1781 = vpop.f32.mrf.mxu0
  %v1782 = vadd.f32 %v1544, %v1781
  %v1783 = vpop.f32.mrf.mxu0
  %v1784 = vadd.f32 %v1548, %v1783
  %v1785 = vpop.f32.mrf.mxu0
  %v1786 = vpop.f32.mrf.mxu0
  %1787 = vdwg.mxu0
  %1788 = vmatprep.subr.bf16.mxu0 0
  %1789 = vmatpush1.bf16.msra.mxu0 0
  %1790 = vmatprep.subr.bf16.mxu0 0
  %1791 = vmatpush1.bf16.msra.mxu0 0
  %1792 = vmatprep.subr.bf16.mxu0 0
  %1793 = vmatpush1.bf16.msra.mxu0 0
  %1794 = vmatprep.subr.bf16.mxu0 0
  %1795 = vmatpush1.bf16.msra.mxu0 0
  %1796 = vmatprep.subr.bf16.mxu0 %v1707
  %1797 = vmatpush1.bf16.msra.mxu0 %v1706
  %1798 = vmatprep.subr.bf16.mxu0 %v1699
  %1799 = vmatpush1.bf16.msra.mxu0 %v1698
  %1800 = vmatprep.subr.bf16.mxu0 %v1691
  %1801 = vmatpush1.bf16.msra.mxu0 %v1690
  %1802 = vmatprep.subr.bf16.mxu0 %v1683
  %1803 = vmatpush1.bf16.msra.mxu0 %v1682
  %1804 = vmatprep.subr.bf16.mxu0 0
  %1805 = vmatpush2.bf16.msra.mxu0 0
  %1806 = vmatprep.subr.bf16.mxu0 0
  %1807 = vmatpush2.bf16.msra.mxu0 0
  %1808 = vmatprep.subr.bf16.mxu0 0
  %1809 = vmatpush2.bf16.msra.mxu0 0
  %1810 = vmatprep.subr.bf16.mxu0 0
  %1811 = vmatpush2.bf16.msra.mxu0 0
  %1812 = vmatprep.subr.bf16.mxu0 0
  %1813 = vmatpush2.bf16.msra.mxu0 0
  %1814 = vmatprep.subr.bf16.mxu0 0
  %1815 = vmatpush2.bf16.msra.mxu0 0
  %1816 = vmatprep.subr.bf16.mxu0 0
  %1817 = vmatpush2.bf16.msra.mxu0 0
  %1818 = vmatprep.subr.bf16.mxu0 0
  %1819 = vmatpush2.bf16.msra.mxu0 0
  %1820 = vmatprep.mubr.bf16.mxu0 0
  %1821 = vmatmul.mubr.bf16.gmra.mxu0 %v1745
  %v1822 = vpop.f32.mrf.mxu0
  %v1823 = vadd.f32 %v1552, %v1822
  %v1824 = vpop.f32.mrf.mxu0
  %v1825 = vadd.f32 %v1556, %v1824
  %v1826 = vpop.f32.mrf.mxu0
  %v1827 = vpop.f32.mrf.mxu0
  %1828 = vdwg.mxu0
  %1829 = vmatprep.subr.bf16.mxu0 0
  %1830 = vmatpush1.bf16.msra.mxu0 0
  %1831 = vmatprep.subr.bf16.mxu0 0
  %1832 = vmatpush1.bf16.msra.mxu0 0
  %1833 = vmatprep.subr.bf16.mxu0 0
  %1834 = vmatpush1.bf16.msra.mxu0 0
  %1835 = vmatprep.subr.bf16.mxu0 0
  %1836 = vmatpush1.bf16.msra.mxu0 0
  %1837 = vmatprep.subr.bf16.mxu0 %v1709
  %1838 = vmatpush1.bf16.msra.mxu0 %v1708
  %1839 = vmatprep.subr.bf16.mxu0 %v1701
  %1840 = vmatpush1.bf16.msra.mxu0 %v1700
  %1841 = vmatprep.subr.bf16.mxu0 %v1693
  %1842 = vmatpush1.bf16.msra.mxu0 %v1692
  %1843 = vmatprep.subr.bf16.mxu0 %v1685
  %1844 = vmatpush1.bf16.msra.mxu0 %v1684
  %1845 = vmatprep.subr.bf16.mxu0 0
  %1846 = vmatpush2.bf16.msra.mxu0 0
  %1847 = vmatprep.subr.bf16.mxu0 0
  %1848 = vmatpush2.bf16.msra.mxu0 0
  %1849 = vmatprep.subr.bf16.mxu0 0
  %1850 = vmatpush2.bf16.msra.mxu0 0
  %1851 = vmatprep.subr.bf16.mxu0 0
  %1852 = vmatpush2.bf16.msra.mxu0 0
  %1853 = vmatprep.subr.bf16.mxu0 0
  %1854 = vmatpush2.bf16.msra.mxu0 0
  %1855 = vmatprep.subr.bf16.mxu0 0
  %1856 = vmatpush2.bf16.msra.mxu0 0
  %1857 = vmatprep.subr.bf16.mxu0 0
  %1858 = vmatpush2.bf16.msra.mxu0 0
  %1859 = vmatprep.subr.bf16.mxu0 0
  %1860 = vmatpush2.bf16.msra.mxu0 0
  %1861 = vmatprep.mubr.bf16.mxu0 0
  %1862 = vmatmul.mubr.bf16.gmra.mxu0 %v1745
  %v1863 = vpop.f32.mrf.mxu0
  %v1864 = vadd.f32 %v1560, %v1863
  %v1865 = vpop.f32.mrf.mxu0
  %v1866 = vadd.f32 %v1564, %v1865
  %v1867 = vpop.f32.mrf.mxu0
  %v1868 = vpop.f32.mrf.mxu0
  %1869 = vdwg.mxu0
  %1870 = vmatprep.subr.bf16.mxu0 0
  %1871 = vmatpush1.bf16.msra.mxu0 0
  %1872 = vmatprep.subr.bf16.mxu0 0
  %1873 = vmatpush1.bf16.msra.mxu0 0
  %1874 = vmatprep.subr.bf16.mxu0 0
  %1875 = vmatpush1.bf16.msra.mxu0 0
  %1876 = vmatprep.subr.bf16.mxu0 0
  %1877 = vmatpush1.bf16.msra.mxu0 0
  %1878 = vmatprep.subr.bf16.mxu0 %v1711
  %1879 = vmatpush1.bf16.msra.mxu0 %v1710
  %1880 = vmatprep.subr.bf16.mxu0 %v1703
  %1881 = vmatpush1.bf16.msra.mxu0 %v1702
  %1882 = vmatprep.subr.bf16.mxu0 %v1695
  %1883 = vmatpush1.bf16.msra.mxu0 %v1694
  %1884 = vmatprep.subr.bf16.mxu0 %v1687
  %1885 = vmatpush1.bf16.msra.mxu0 %v1686
  %1886 = vmatprep.subr.bf16.mxu0 0
  %1887 = vmatpush2.bf16.msra.mxu0 0
  %1888 = vmatprep.subr.bf16.mxu0 0
  %1889 = vmatpush2.bf16.msra.mxu0 0
  %1890 = vmatprep.subr.bf16.mxu0 0
  %1891 = vmatpush2.bf16.msra.mxu0 0
  %1892 = vmatprep.subr.bf16.mxu0 0
  %1893 = vmatpush2.bf16.msra.mxu0 0
  %1894 = vmatprep.subr.bf16.mxu0 0
  %1895 = vmatpush2.bf16.msra.mxu0 0
  %1896 = vmatprep.subr.bf16.mxu0 0
  %1897 = vmatpush2.bf16.msra.mxu0 0
  %1898 = vmatprep.subr.bf16.mxu0 0
  %1899 = vmatpush2.bf16.msra.mxu0 0
  %1900 = vmatprep.subr.bf16.mxu0 0
  %1901 = vmatpush2.bf16.msra.mxu0 0
  %1902 = vmatprep.mubr.bf16.mxu0 0
  %1903 = vmatmul.mubr.bf16.gmra.mxu0 %v1745
  %v1904 = vpop.f32.mrf.mxu0
  %v1905 = vadd.f32 %v1568, %v1904
  %v1906 = vpop.f32.mrf.mxu0
  %v1907 = vadd.f32 %v1572, %v1906
  %v1908 = vpop.f32.mrf.mxu0
  %v1909 = vpop.f32.mrf.mxu0
  %1910 = vdwg.mxu0
  %v1919 = vcombine.low %v1782, %v1784
  %v1920 = vcombine.low %v1823, %v1825
  %v1922 = vunpack.c.l.s4 1983009808
  %v1923 = vunpack.c.0.s8 %v1922
  %v1924 = vlaneseq
  %v1925 = vshrl.u32 %v1924, 7
  %v1926 = vsub.s32 %v1923, %v1925
  %v1927 = vrot.slane %v1919, %v1926
  %v1929 = vunpack.c.l.s4 1983009808
  %v1930 = vunpack.c.0.s8 %v1929
  %v1931 = vlaneseq
  %v1932 = vshrl.u32 %v1931, 7
  %v1933 = vsub.s32 %v1930, %v1932
  %v1934 = vrot.slane %v1920, %v1933
  %v1935 = vcombine.low %v1927, %v1934
  %v1936 = vcombine.low %v1864, %v1866
  %v1937 = vcombine.low %v1905, %v1907
  %v1939 = vunpack.c.l.s4 1983009808
  %v1940 = vunpack.c.0.s8 %v1939
  %v1941 = vlaneseq
  %v1942 = vshrl.u32 %v1941, 7
  %v1943 = vsub.s32 %v1940, %v1942
  %v1944 = vrot.slane %v1936, %v1943
  %v1946 = vunpack.c.l.s4 1983009808
  %v1947 = vunpack.c.0.s8 %v1946
  %v1948 = vlaneseq
  %v1949 = vshrl.u32 %v1948, 7
  %v1950 = vsub.s32 %v1947, %v1949
  %v1951 = vrot.slane %v1937, %v1950
  %v1952 = vcombine.low %v1944, %v1951
  %1955 = vst [vmem:[%s8] sm:$0xff] %v1935
  %1956 = vst [vmem:[%s8 + $0x8] sm:$0xff] %v1952
  // Predicated region
  $region30: #{base_temp_model_forward.1} parent=0 // pred_check
    _
  $region31: #{base_temp_model_forward.1} parent=0 // pred_check_branch
    %1958 = sbr.rel (0) target = $region33
  $region32: #{base_temp_model_forward.1} parent=0 // pred_region
    _
  $region33: #{base_temp_model_forward.1} parent=0 // pred_fallthru
    _
  // Predicated region
  $region34: #{base_temp_model_forward.1} parent=0 // pred_check
    _
  $region35: #{base_temp_model_forward.1} parent=0 // pred_check_branch
    %1960 = sbr.rel (0) target = $region37
  $region36: #{base_temp_model_forward.1} parent=0 // pred_region
    _
  $region37: #{base_temp_model_forward.1} parent=0 // pred_fallthru
    _
  // Predicated region
  $region38: #{base_temp_model_forward.1} parent=0 // pred_check
    _
  $region39: #{base_temp_model_forward.1} parent=0 // pred_check_branch
    %1962 = sbr.rel (0) target = $region41
  $region40: #{base_temp_model_forward.1} parent=0 // pred_region
    _
  $region41: #{base_temp_model_forward.1} parent=0 // pred_fallthru
    _
  // Predicated region
  $region42: #{base_temp_model_forward.1} parent=0 // pred_check
    _
  $region43: #{base_temp_model_forward.1} parent=0 // pred_check_branch
    %1964 = sbr.rel (0) target = $region45
  $region44: #{base_temp_model_forward.1} parent=0 // pred_region
    _
  $region45: #{base_temp_model_forward.1} parent=0 // pred_fallthru
    _

</llo_original>
